<compile_context>
chip_gen: v7x
topology: tpu7x:2x2x1
jax: 0.10.0
libtpu: 0.0.40
codegen_flags: <defaults>
</compile_context>

<pallas_src>
import jax
import jax.numpy as jnp
from jax.experimental import pallas as pl
from jax.experimental.pallas import tpu as pltpu

NUM_LAYERS = 3  # num_cross_layers

# Rows of the packed per-layer parameter slab, shape (L, 4, D):
_ROW_B = 0   # nn.Linear bias b_l
_ROW_CB = 1  # CrossInteraction bias
_ROW_V = 2   # v_l = W_l^T @ w_l   (precomputed, input-feature space)
_ROW_C = 3   # c_l = b_l . w_l     (scalar, broadcast across D)


def cn_mlp_kernel(x_ref, wt_ref, params_ref, out_ref):
    # x_ref:      (tm, D)    batch tile (also serves as X_0), f32
    # wt_ref:     (L, D, D)  per-layer Linear weights, (in, out) layout, bf16
    # params_ref: (L, 4, D)  packed f32 params (see _ROW_* above)
    x0 = x_ref[...].astype(jnp.float32)
    xi = x0
    for l in range(NUM_LAYERS):  # static unroll over the 3 cross/MLP layers
        p = params_ref[l]                               # (4, D) f32
        b = p[_ROW_B:_ROW_B + 1, :]
        cb = p[_ROW_CB:_ROW_CB + 1, :]
        v = p[_ROW_V:_ROW_V + 1, :]
        c = p[_ROW_C:_ROW_C + 1, :]                     # c_l broadcast over D
        # MXU: bf16 operands, f32 accumulation.
        h = jnp.dot(xi.astype(jnp.bfloat16), wt_ref[l],
                    preferred_element_type=jnp.float32) + b
        # Cross scalar s = X_l @ v_l  (VPU mul + XLU reduce, concurrent w/ MXU).
        s = jnp.sum(xi * v, axis=-1, keepdims=True)     # (tm, 1)
        cross = (s + c) * x0 + cb                       # == (s + c_l) * X_0 + cb
        xi = jnp.maximum(cross + h, 0.0)                # ReLU
    out_ref[...] = xi.astype(out_ref.dtype)


def _choose_tm(batch):
    """Largest power-of-two-ish tile <= 256 dividing the batch, preferring
    >= 2 grid steps so both v7x TensorCores get work under ('parallel',)."""
    tm = min(256, batch)
    while tm > 8 and batch % tm != 0:
        tm //= 2
    if batch % tm != 0:
        tm = batch
    if batch // tm < 2 and tm >= 16 and tm % 2 == 0:
        tm //= 2
    return tm


def cn_mlp_block(x, wt_bf16, params, *, tm=None, single_buffer_consts=True):
    B, D = x.shape
    L = wt_bf16.shape[0]
    assert wt_bf16.shape == (L, D, D)
    assert params.shape == (L, 4, D)
    if tm is None:
        tm = _choose_tm(B)
    assert B % tm == 0, "batch must be divisible by the batch tile"

    # Constant operands: index_map is constant across the grid -> single-buffer.
    const_kwargs = (
        dict(pipeline_mode=pl.Buffered(1)) if single_buffer_consts else {}
    )
    wt_spec = pl.BlockSpec((L, D, D), lambda i: (0, 0, 0), **const_kwargs)
    p_spec = pl.BlockSpec((L, 4, D), lambda i: (0, 0, 0), **const_kwargs)

    # Explicit VMEM budget from the actual footprint (+40% headroom),
    # clamped to [32 MiB, 64 MiB] so it is safe on every generation (v7x = 64 MiB).
    n_wbuf = 1 if single_buffer_consts else 2
    itemsize = jnp.dtype(x.dtype).itemsize
    footprint = (
        n_wbuf * L * D * D * jnp.dtype(wt_bf16.dtype).itemsize  # weight stack
        + n_wbuf * L * 8 * D * 4                                # param slab (4->8 sublane pad)
        + 2 * 2 * tm * D * itemsize                             # x / out double buffers
        + 8 * tm * D * 4                                        # f32 working set headroom
    )
    vmem_limit = int(min(max(int(footprint * 1.4), 32 * 2**20), 64 * 2**20))

    return pl.pallas_call(
        cn_mlp_kernel,
        out_shape=jax.ShapeDtypeStruct((B, D), x.dtype),
        grid_spec=pltpu.PrefetchScalarGridSpec(
            num_scalar_prefetch=0,
            grid=(B // tm,),
            in_specs=[
                pl.BlockSpec((tm, D), lambda i: (i, 0)),
                wt_spec,
                p_spec,
            ],
            out_specs=pl.BlockSpec((tm, D), lambda i: (i, 0)),
        ),
        compiler_params=pltpu.CompilerParams(
            dimension_semantics=("parallel",),
            vmem_limit_bytes=vmem_limit,
        ),
    )(x, wt_bf16, params)


def pack_params(wt_f32, b, cw, cb):
    """Pre-pack module parameters for the kernel.

    wt_f32: (L, D, D) Linear weights already transposed to (in, out) layout.
    b, cw, cb: (L, 1, D) Linear bias, CrossInteraction weight (Linear(D,1)),
               CrossInteraction bias.
    Returns (bf16 weight stack, (L, 4, D) f32 packed param slab)."""
    L, D, _ = wt_f32.shape
    v = jnp.einsum("lio,lo->li", wt_f32, cw[:, 0, :])     # W_l^T w_l,  (L, D)
    c = jnp.einsum("ld,ld->l", b[:, 0, :], cw[:, 0, :])   # b_l . w_l,  (L,)
    params = jnp.stack(
        [b[:, 0, :], cb[:, 0, :], v, jnp.broadcast_to(c[:, None], (L, D))],
        axis=1,
    ).astype(jnp.float32)                                  # (L, 4, D)
    return wt_f32.astype(jnp.bfloat16), params


def ref_forward_f32(x, wt, b, cw, cb):
    """Pure-f32 JAX reference mirroring the PyTorch module formula exactly."""
    x0, xi = x, x
    for l in range(NUM_LAYERS):
        h = xi @ wt[l] + b[l]
        s = jnp.sum(h * cw[l], axis=-1, keepdims=True)
        xi = jax.nn.relu(s * x0 + cb[l] + h)
    return xi


def ref_forward_kernel_math(x, wt_bf16, params):
    """Mirrors the kernel arithmetic (bf16 MXU inputs, precomputed v/c, f32 else)."""
    x0 = x.astype(jnp.float32)
    xi = x0
    for l in range(NUM_LAYERS):
        p = params[l]
        b, cb, v, c = p[0:1], p[1:2], p[2:3], p[3:4]
        h = jnp.dot(xi.astype(jnp.bfloat16), wt_bf16[l],
                    preferred_element_type=jnp.float32) + b
        s = jnp.sum(xi * v, axis=-1, keepdims=True)
        xi = jnp.maximum((s + c) * x0 + cb + h, 0.0)
    return xi.astype(x.dtype)


if __name__ == "__main__":
    # Small but lane-aligned shapes: batch=128, input_dim=128 (D multiple of 128
    # keeps MXU/VPU lanes full and output stores unmasked).
    B, D = 128, 128

    key = jax.random.PRNGKey(0)
    kx, kw, kb, kcw = jax.random.split(key, 4)
    bound = 1.0 / (D ** 0.5)  # PyTorch nn.Linear default init bound

    x = jax.random.normal(kx, (B, D), dtype=jnp.float32)
    # nn.Linear(D, D) weights, already transposed to (in, out)
    wt = jax.random.uniform(kw, (NUM_LAYERS, D, D), jnp.float32, -bound, bound)
    b = jax.random.uniform(kb, (NUM_LAYERS, 1, D), jnp.float32, -bound, bound)
    # CrossInteraction: Linear(D, 1, bias=False) weight, stored as (1, D)
    cw = jax.random.uniform(kcw, (NUM_LAYERS, 1, D), jnp.float32, -bound, bound)
    # CrossInteraction bias: nn.Parameter(torch.zeros(D))
    cb = jnp.zeros((NUM_LAYERS, 1, D), dtype=jnp.float32)

    wt_bf16, params = pack_params(wt, b, cw, cb)

    try:
        out = jax.block_until_ready(cn_mlp_block(x, wt_bf16, params))
    except Exception:
        # Fallback: default double-buffered constants if Buffered(1) is rejected
        # by this jax/libtpu version.
        out = jax.block_until_ready(
            cn_mlp_block(x, wt_bf16, params, single_buffer_consts=False))

    assert out.shape == (B, D)

    # 1) Exact-math check: reference uses the same bf16/f32 arithmetic as the kernel.
    ref_exact = ref_forward_kernel_math(x, wt_bf16, params)
    assert jnp.allclose(out, ref_exact, atol=1e-3, rtol=1e-3), \
        "mismatch vs kernel-math JAX reference"

    # 2) Semantic check vs the pure-f32 PyTorch-equivalent formula
    #    (difference is only bf16 weight/activation rounding in the matmuls).
    ref_f32 = ref_forward_f32(x, wt, b, cw, cb)
    assert jnp.allclose(out, ref_f32, atol=3e-1, rtol=1e-1), \
        "mismatch vs f32 reference beyond expected bf16 rounding"

    print("KERNEL_OK")
</pallas_src>

<mosaic_0001>
module attributes {stable_mosaic.version = 11 : i64} {
  func.func @cn_mlp_kernel(%arg0: i32, %arg1: memref<64x128xf32, #tpu.memory_space<vmem>>, %arg2: memref<3x128x128xbf16, #tpu.memory_space<vmem>>, %arg3: memref<3x4x128xf32, #tpu.memory_space<vmem>>, %arg4: memref<64x128xf32, #tpu.memory_space<vmem>>) attributes {dimension_semantics = [#tpu.dimension_semantics<parallel>], iteration_bounds = array<i64: 2>, scalar_prefetch = 0 : i64, scratch_operands = 0 : i64, tpu.core_type = #tpu.core_type<tc>, window_params = [{transform_indices = @transform_0, window_bounds = array<i64: 64, 128>}, {pipeline_mode = #tpu.pipeline_mode<synchronous>, transform_indices = @transform_1, window_bounds = array<i64: 3, 128, 128>}, {pipeline_mode = #tpu.pipeline_mode<synchronous>, transform_indices = @transform_2, window_bounds = array<i64: 3, 4, 128>}, {transform_indices = @transform_3, window_bounds = array<i64: 64, 128>}]} {
    %c0 = arith.constant 0 : index
    %c0_0 = arith.constant 0 : index
    %0 = vector.load %arg1[%c0, %c0_0] : memref<64x128xf32, #tpu.memory_space<vmem>>, vector<64x128xf32>
    %c0_1 = arith.constant 0 : index
    %c0_2 = arith.constant 0 : index
    %c0_3 = arith.constant 0 : index
    %1 = vector.load %arg3[%c0_1, %c0_2, %c0_3] : memref<3x4x128xf32, #tpu.memory_space<vmem>>, vector<1x4x128xf32>
    %2 = vector.shape_cast %1 : vector<1x4x128xf32> to vector<4x128xf32>
    %3 = vector.extract_strided_slice %2 {offsets = [0, 0], sizes = [1, 128], strides = [1, 1]} : vector<4x128xf32> to vector<1x128xf32>
    %4 = vector.extract_strided_slice %2 {offsets = [1, 0], sizes = [1, 128], strides = [1, 1]} : vector<4x128xf32> to vector<1x128xf32>
    %5 = vector.extract_strided_slice %2 {offsets = [2, 0], sizes = [1, 128], strides = [1, 1]} : vector<4x128xf32> to vector<1x128xf32>
    %6 = vector.extract_strided_slice %2 {offsets = [3, 0], sizes = [1, 128], strides = [1, 1]} : vector<4x128xf32> to vector<1x128xf32>
    %7 = arith.truncf %0 : vector<64x128xf32> to vector<64x128xbf16>
    %c0_4 = arith.constant 0 : index
    %c0_5 = arith.constant 0 : index
    %c0_6 = arith.constant 0 : index
    %8 = vector.load %arg2[%c0_4, %c0_5, %c0_6] : memref<3x128x128xbf16, #tpu.memory_space<vmem>>, vector<1x128x128xbf16>
    %9 = vector.shape_cast %8 : vector<1x128x128xbf16> to vector<128x128xbf16>
    %cst = arith.constant dense<0.000000e+00> : vector<64x128xf32>
    %10 = tpu.matmul %7, %9, %cst {dimension_numbers = #tpu.dot_dimension_numbers<[1], [0], [0], [1], [0, 0, 1, 1], [], []>} : vector<64x128xbf16>, vector<128x128xbf16>, vector<64x128xf32> -> vector<64x128xf32>
    %11 = vector.broadcast %3 : vector<1x128xf32> to vector<64x128xf32>
    %12 = arith.addf %10, %11 : vector<64x128xf32>
    %13 = vector.broadcast %5 : vector<1x128xf32> to vector<64x128xf32>
    %14 = arith.mulf %0, %13 : vector<64x128xf32>
    %cst_7 = arith.constant dense<0.000000e+00> : vector<64xf32>
    %15 = vector.multi_reduction <add>, %14, %cst_7 [1] : vector<64x128xf32> to vector<64xf32>
    %16 = vector.shape_cast %15 : vector<64xf32> to vector<64x1xf32>
    %17 = vector.broadcast %16 : vector<64x1xf32> to vector<64x128xf32>
    %18 = vector.broadcast %6 : vector<1x128xf32> to vector<64x128xf32>
    %19 = arith.addf %17, %18 : vector<64x128xf32>
    %20 = arith.mulf %19, %0 : vector<64x128xf32>
    %21 = vector.broadcast %4 : vector<1x128xf32> to vector<64x128xf32>
    %22 = arith.addf %20, %21 : vector<64x128xf32>
    %23 = arith.addf %22, %12 : vector<64x128xf32>
    %cst_8 = arith.constant 0.000000e+00 : f32
    %24 = vector.broadcast %cst_8 : f32 to vector<64x128xf32>
    %25 = arith.maximumf %23, %24 : vector<64x128xf32>
    %c1 = arith.constant 1 : index
    %c0_9 = arith.constant 0 : index
    %c0_10 = arith.constant 0 : index
    %26 = vector.load %arg3[%c1, %c0_9, %c0_10] : memref<3x4x128xf32, #tpu.memory_space<vmem>>, vector<1x4x128xf32>
    %27 = vector.shape_cast %26 : vector<1x4x128xf32> to vector<4x128xf32>
    %28 = vector.extract_strided_slice %27 {offsets = [0, 0], sizes = [1, 128], strides = [1, 1]} : vector<4x128xf32> to vector<1x128xf32>
    %29 = vector.extract_strided_slice %27 {offsets = [1, 0], sizes = [1, 128], strides = [1, 1]} : vector<4x128xf32> to vector<1x128xf32>
    %30 = vector.extract_strided_slice %27 {offsets = [2, 0], sizes = [1, 128], strides = [1, 1]} : vector<4x128xf32> to vector<1x128xf32>
    %31 = vector.extract_strided_slice %27 {offsets = [3, 0], sizes = [1, 128], strides = [1, 1]} : vector<4x128xf32> to vector<1x128xf32>
    %32 = arith.truncf %25 : vector<64x128xf32> to vector<64x128xbf16>
    %c1_11 = arith.constant 1 : index
    %c0_12 = arith.constant 0 : index
    %c0_13 = arith.constant 0 : index
    %33 = vector.load %arg2[%c1_11, %c0_12, %c0_13] : memref<3x128x128xbf16, #tpu.memory_space<vmem>>, vector<1x128x128xbf16>
    %34 = vector.shape_cast %33 : vector<1x128x128xbf16> to vector<128x128xbf16>
    %cst_14 = arith.constant dense<0.000000e+00> : vector<64x128xf32>
    %35 = tpu.matmul %32, %34, %cst_14 {dimension_numbers = #tpu.dot_dimension_numbers<[1], [0], [0], [1], [0, 0, 1, 1], [], []>} : vector<64x128xbf16>, vector<128x128xbf16>, vector<64x128xf32> -> vector<64x128xf32>
    %36 = vector.broadcast %28 : vector<1x128xf32> to vector<64x128xf32>
    %37 = arith.addf %35, %36 : vector<64x128xf32>
    %38 = vector.broadcast %30 : vector<1x128xf32> to vector<64x128xf32>
    %39 = arith.mulf %25, %38 : vector<64x128xf32>
    %cst_15 = arith.constant dense<0.000000e+00> : vector<64xf32>
    %40 = vector.multi_reduction <add>, %39, %cst_15 [1] : vector<64x128xf32> to vector<64xf32>
    %41 = vector.shape_cast %40 : vector<64xf32> to vector<64x1xf32>
    %42 = vector.broadcast %41 : vector<64x1xf32> to vector<64x128xf32>
    %43 = vector.broadcast %31 : vector<1x128xf32> to vector<64x128xf32>
    %44 = arith.addf %42, %43 : vector<64x128xf32>
    %45 = arith.mulf %44, %0 : vector<64x128xf32>
    %46 = vector.broadcast %29 : vector<1x128xf32> to vector<64x128xf32>
    %47 = arith.addf %45, %46 : vector<64x128xf32>
    %48 = arith.addf %47, %37 : vector<64x128xf32>
    %cst_16 = arith.constant 0.000000e+00 : f32
    %49 = vector.broadcast %cst_16 : f32 to vector<64x128xf32>
    %50 = arith.maximumf %48, %49 : vector<64x128xf32>
    %c2 = arith.constant 2 : index
    %c0_17 = arith.constant 0 : index
    %c0_18 = arith.constant 0 : index
    %51 = vector.load %arg3[%c2, %c0_17, %c0_18] : memref<3x4x128xf32, #tpu.memory_space<vmem>>, vector<1x4x128xf32>
    %52 = vector.shape_cast %51 : vector<1x4x128xf32> to vector<4x128xf32>
    %53 = vector.extract_strided_slice %52 {offsets = [0, 0], sizes = [1, 128], strides = [1, 1]} : vector<4x128xf32> to vector<1x128xf32>
    %54 = vector.extract_strided_slice %52 {offsets = [1, 0], sizes = [1, 128], strides = [1, 1]} : vector<4x128xf32> to vector<1x128xf32>
    %55 = vector.extract_strided_slice %52 {offsets = [2, 0], sizes = [1, 128], strides = [1, 1]} : vector<4x128xf32> to vector<1x128xf32>
    %56 = vector.extract_strided_slice %52 {offsets = [3, 0], sizes = [1, 128], strides = [1, 1]} : vector<4x128xf32> to vector<1x128xf32>
    %57 = arith.truncf %50 : vector<64x128xf32> to vector<64x128xbf16>
    %c2_19 = arith.constant 2 : index
    %c0_20 = arith.constant 0 : index
    %c0_21 = arith.constant 0 : index
    %58 = vector.load %arg2[%c2_19, %c0_20, %c0_21] : memref<3x128x128xbf16, #tpu.memory_space<vmem>>, vector<1x128x128xbf16>
    %59 = vector.shape_cast %58 : vector<1x128x128xbf16> to vector<128x128xbf16>
    %cst_22 = arith.constant dense<0.000000e+00> : vector<64x128xf32>
    %60 = tpu.matmul %57, %59, %cst_22 {dimension_numbers = #tpu.dot_dimension_numbers<[1], [0], [0], [1], [0, 0, 1, 1], [], []>} : vector<64x128xbf16>, vector<128x128xbf16>, vector<64x128xf32> -> vector<64x128xf32>
    %61 = vector.broadcast %53 : vector<1x128xf32> to vector<64x128xf32>
    %62 = arith.addf %60, %61 : vector<64x128xf32>
    %63 = vector.broadcast %55 : vector<1x128xf32> to vector<64x128xf32>
    %64 = arith.mulf %50, %63 : vector<64x128xf32>
    %cst_23 = arith.constant dense<0.000000e+00> : vector<64xf32>
    %65 = vector.multi_reduction <add>, %64, %cst_23 [1] : vector<64x128xf32> to vector<64xf32>
    %66 = vector.shape_cast %65 : vector<64xf32> to vector<64x1xf32>
    %67 = vector.broadcast %66 : vector<64x1xf32> to vector<64x128xf32>
    %68 = vector.broadcast %56 : vector<1x128xf32> to vector<64x128xf32>
    %69 = arith.addf %67, %68 : vector<64x128xf32>
    %70 = arith.mulf %69, %0 : vector<64x128xf32>
    %71 = vector.broadcast %54 : vector<1x128xf32> to vector<64x128xf32>
    %72 = arith.addf %70, %71 : vector<64x128xf32>
    %73 = arith.addf %72, %62 : vector<64x128xf32>
    %cst_24 = arith.constant 0.000000e+00 : f32
    %74 = vector.broadcast %cst_24 : f32 to vector<64x128xf32>
    %75 = arith.maximumf %73, %74 : vector<64x128xf32>
    %c0_25 = arith.constant 0 : index
    %c0_26 = arith.constant 0 : index
    %76 = vector.load %arg4[%c0_25, %c0_26] : memref<64x128xf32, #tpu.memory_space<vmem>>, vector<64x128xf32>
    tpu.vector_store %arg4[%c0_25, %c0_26], %75 {strides = array<i32>} : memref<64x128xf32, #tpu.memory_space<vmem>>, vector<64x128xf32>,
    return
  }
  func.func @transform_0(%arg0: i32) -> (i32, i32) {
    %c0_i32 = arith.constant 0 : i32
    %c0_i32_0 = arith.constant 0 : i32
    return %arg0, %c0_i32 : i32, i32
  }
  func.func @transform_1(%arg0: i32) -> (i32, i32, i32) {
    %c0_i32 = arith.constant 0 : i32
    %c0_i32_0 = arith.constant 0 : i32
    %c0_i32_1 = arith.constant 0 : i32
    %c0_i32_2 = arith.constant 0 : i32
    return %c0_i32, %c0_i32_0, %c0_i32_1 : i32, i32, i32
  }
  func.func @transform_2(%arg0: i32) -> (i32, i32, i32) {
    %c0_i32 = arith.constant 0 : i32
    %c0_i32_0 = arith.constant 0 : i32
    %c0_i32_1 = arith.constant 0 : i32
    %c0_i32_2 = arith.constant 0 : i32
    return %c0_i32, %c0_i32_0, %c0_i32_1 : i32, i32, i32
  }
  func.func @transform_3(%arg0: i32) -> (i32, i32) {
    %c0_i32 = arith.constant 0 : i32
    %c0_i32_0 = arith.constant 0 : i32
    return %arg0, %c0_i32 : i32, i32
  }
}

module attributes {stable_mosaic.version = 11 : i64} {
  func.func @cn_mlp_kernel(%arg0: i32, %arg1: memref<64x128xf32, #tpu.memory_space<vmem>>, %arg2: memref<3x128x128xbf16, #tpu.memory_space<vmem>>, %arg3: memref<3x4x128xf32, #tpu.memory_space<vmem>>, %arg4: memref<64x128xf32, #tpu.memory_space<vmem>>) attributes {dimension_semantics = [#tpu.dimension_semantics<parallel>], iteration_bounds = array<i64: 2>, scalar_prefetch = 0 : i64, scratch_operands = 0 : i64, tpu.core_type = #tpu.core_type<tc>, window_params = [{transform_indices = @transform_0, window_bounds = array<i64: 64, 128>}, {pipeline_mode = #tpu.pipeline_mode<synchronous>, transform_indices = @transform_1, window_bounds = array<i64: 3, 128, 128>}, {pipeline_mode = #tpu.pipeline_mode<synchronous>, transform_indices = @transform_2, window_bounds = array<i64: 3, 4, 128>}, {transform_indices = @transform_3, window_bounds = array<i64: 64, 128>}]} {
    %c0 = arith.constant 0 : index
    %c0_0 = arith.constant 0 : index
    %0 = vector.load %arg1[%c0, %c0_0] : memref<64x128xf32, #tpu.memory_space<vmem>>, vector<64x128xf32>
    %c0_1 = arith.constant 0 : index
    %c0_2 = arith.constant 0 : index
    %c0_3 = arith.constant 0 : index
    %1 = vector.load %arg3[%c0_1, %c0_2, %c0_3] : memref<3x4x128xf32, #tpu.memory_space<vmem>>, vector<1x4x128xf32>
    %2 = vector.shape_cast %1 : vector<1x4x128xf32> to vector<4x128xf32>
    %3 = vector.extract_strided_slice %2 {offsets = [0, 0], sizes = [1, 128], strides = [1, 1]} : vector<4x128xf32> to vector<1x128xf32>
    %4 = vector.extract_strided_slice %2 {offsets = [1, 0], sizes = [1, 128], strides = [1, 1]} : vector<4x128xf32> to vector<1x128xf32>
    %5 = vector.extract_strided_slice %2 {offsets = [2, 0], sizes = [1, 128], strides = [1, 1]} : vector<4x128xf32> to vector<1x128xf32>
    %6 = vector.extract_strided_slice %2 {offsets = [3, 0], sizes = [1, 128], strides = [1, 1]} : vector<4x128xf32> to vector<1x128xf32>
    %7 = arith.truncf %0 : vector<64x128xf32> to vector<64x128xbf16>
    %c0_4 = arith.constant 0 : index
    %c0_5 = arith.constant 0 : index
    %c0_6 = arith.constant 0 : index
    %8 = vector.load %arg2[%c0_4, %c0_5, %c0_6] : memref<3x128x128xbf16, #tpu.memory_space<vmem>>, vector<1x128x128xbf16>
    %9 = vector.shape_cast %8 : vector<1x128x128xbf16> to vector<128x128xbf16>
    %cst = arith.constant dense<0.000000e+00> : vector<64x128xf32>
    %10 = tpu.matmul %7, %9, %cst {dimension_numbers = #tpu.dot_dimension_numbers<[1], [0], [0], [1], [0, 0, 1, 1], [], []>} : vector<64x128xbf16>, vector<128x128xbf16>, vector<64x128xf32> -> vector<64x128xf32>
    %11 = vector.broadcast %3 : vector<1x128xf32> to vector<64x128xf32>
    %12 = arith.addf %10, %11 : vector<64x128xf32>
    %13 = vector.broadcast %5 : vector<1x128xf32> to vector<64x128xf32>
    %14 = arith.mulf %0, %13 : vector<64x128xf32>
    %cst_7 = arith.constant dense<0.000000e+00> : vector<64xf32>
    %15 = vector.multi_reduction <add>, %14, %cst_7 [1] : vector<64x128xf32> to vector<64xf32>
    %16 = vector.shape_cast %15 : vector<64xf32> to vector<64x1xf32>
    %17 = vector.broadcast %16 : vector<64x1xf32> to vector<64x128xf32>
    %18 = vector.broadcast %6 : vector<1x128xf32> to vector<64x128xf32>
    %19 = arith.addf %17, %18 : vector<64x128xf32>
    %20 = arith.mulf %19, %0 : vector<64x128xf32>
    %21 = vector.broadcast %4 : vector<1x128xf32> to vector<64x128xf32>
    %22 = arith.addf %20, %21 : vector<64x128xf32>
    %23 = arith.addf %22, %12 : vector<64x128xf32>
    %cst_8 = arith.constant 0.000000e+00 : f32
    %24 = vector.broadcast %cst_8 : f32 to vector<64x128xf32>
    %25 = arith.maximumf %23, %24 : vector<64x128xf32>
    %c1 = arith.constant 1 : index
    %c0_9 = arith.constant 0 : index
    %c0_10 = arith.constant 0 : index
    %26 = vector.load %arg3[%c1, %c0_9, %c0_10] : memref<3x4x128xf32, #tpu.memory_space<vmem>>, vector<1x4x128xf32>
    %27 = vector.shape_cast %26 : vector<1x4x128xf32> to vector<4x128xf32>
    %28 = vector.extract_strided_slice %27 {offsets = [0, 0], sizes = [1, 128], strides = [1, 1]} : vector<4x128xf32> to vector<1x128xf32>
    %29 = vector.extract_strided_slice %27 {offsets = [1, 0], sizes = [1, 128], strides = [1, 1]} : vector<4x128xf32> to vector<1x128xf32>
    %30 = vector.extract_strided_slice %27 {offsets = [2, 0], sizes = [1, 128], strides = [1, 1]} : vector<4x128xf32> to vector<1x128xf32>
    %31 = vector.extract_strided_slice %27 {offsets = [3, 0], sizes = [1, 128], strides = [1, 1]} : vector<4x128xf32> to vector<1x128xf32>
    %32 = arith.truncf %25 : vector<64x128xf32> to vector<64x128xbf16>
    %c1_11 = arith.constant 1 : index
    %c0_12 = arith.constant 0 : index
    %c0_13 = arith.constant 0 : index
    %33 = vector.load %arg2[%c1_11, %c0_12, %c0_13] : memref<3x128x128xbf16, #tpu.memory_space<vmem>>, vector<1x128x128xbf16>
    %34 = vector.shape_cast %33 : vector<1x128x128xbf16> to vector<128x128xbf16>
    %cst_14 = arith.constant dense<0.000000e+00> : vector<64x128xf32>
    %35 = tpu.matmul %32, %34, %cst_14 {dimension_numbers = #tpu.dot_dimension_numbers<[1], [0], [0], [1], [0, 0, 1, 1], [], []>} : vector<64x128xbf16>, vector<128x128xbf16>, vector<64x128xf32> -> vector<64x128xf32>
    %36 = vector.broadcast %28 : vector<1x128xf32> to vector<64x128xf32>
    %37 = arith.addf %35, %36 : vector<64x128xf32>
    %38 = vector.broadcast %30 : vector<1x128xf32> to vector<64x128xf32>
    %39 = arith.mulf %25, %38 : vector<64x128xf32>
    %cst_15 = arith.constant dense<0.000000e+00> : vector<64xf32>
    %40 = vector.multi_reduction <add>, %39, %cst_15 [1] : vector<64x128xf32> to vector<64xf32>
    %41 = vector.shape_cast %40 : vector<64xf32> to vector<64x1xf32>
    %42 = vector.broadcast %41 : vector<64x1xf32> to vector<64x128xf32>
    %43 = vector.broadcast %31 : vector<1x128xf32> to vector<64x128xf32>
    %44 = arith.addf %42, %43 : vector<64x128xf32>
    %45 = arith.mulf %44, %0 : vector<64x128xf32>
    %46 = vector.broadcast %29 : vector<1x128xf32> to vector<64x128xf32>
    %47 = arith.addf %45, %46 : vector<64x128xf32>
    %48 = arith.addf %47, %37 : vector<64x128xf32>
    %cst_16 = arith.constant 0.000000e+00 : f32
    %49 = vector.broadcast %cst_16 : f32 to vector<64x128xf32>
    %50 = arith.maximumf %48, %49 : vector<64x128xf32>
    %c2 = arith.constant 2 : index
    %c0_17 = arith.constant 0 : index
    %c0_18 = arith.constant 0 : index
    %51 = vector.load %arg3[%c2, %c0_17, %c0_18] : memref<3x4x128xf32, #tpu.memory_space<vmem>>, vector<1x4x128xf32>
    %52 = vector.shape_cast %51 : vector<1x4x128xf32> to vector<4x128xf32>
    %53 = vector.extract_strided_slice %52 {offsets = [0, 0], sizes = [1, 128], strides = [1, 1]} : vector<4x128xf32> to vector<1x128xf32>
    %54 = vector.extract_strided_slice %52 {offsets = [1, 0], sizes = [1, 128], strides = [1, 1]} : vector<4x128xf32> to vector<1x128xf32>
    %55 = vector.extract_strided_slice %52 {offsets = [2, 0], sizes = [1, 128], strides = [1, 1]} : vector<4x128xf32> to vector<1x128xf32>
    %56 = vector.extract_strided_slice %52 {offsets = [3, 0], sizes = [1, 128], strides = [1, 1]} : vector<4x128xf32> to vector<1x128xf32>
    %57 = arith.truncf %50 : vector<64x128xf32> to vector<64x128xbf16>
    %c2_19 = arith.constant 2 : index
    %c0_20 = arith.constant 0 : index
    %c0_21 = arith.constant 0 : index
    %58 = vector.load %arg2[%c2_19, %c0_20, %c0_21] : memref<3x128x128xbf16, #tpu.memory_space<vmem>>, vector<1x128x128xbf16>
    %59 = vector.shape_cast %58 : vector<1x128x128xbf16> to vector<128x128xbf16>
    %cst_22 = arith.constant dense<0.000000e+00> : vector<64x128xf32>
    %60 = tpu.matmul %57, %59, %cst_22 {dimension_numbers = #tpu.dot_dimension_numbers<[1], [0], [0], [1], [0, 0, 1, 1], [], []>} : vector<64x128xbf16>, vector<128x128xbf16>, vector<64x128xf32> -> vector<64x128xf32>
    %61 = vector.broadcast %53 : vector<1x128xf32> to vector<64x128xf32>
    %62 = arith.addf %60, %61 : vector<64x128xf32>
    %63 = vector.broadcast %55 : vector<1x128xf32> to vector<64x128xf32>
    %64 = arith.mulf %50, %63 : vector<64x128xf32>
    %cst_23 = arith.constant dense<0.000000e+00> : vector<64xf32>
    %65 = vector.multi_reduction <add>, %64, %cst_23 [1] : vector<64x128xf32> to vector<64xf32>
    %66 = vector.shape_cast %65 : vector<64xf32> to vector<64x1xf32>
    %67 = vector.broadcast %66 : vector<64x1xf32> to vector<64x128xf32>
    %68 = vector.broadcast %56 : vector<1x128xf32> to vector<64x128xf32>
    %69 = arith.addf %67, %68 : vector<64x128xf32>
    %70 = arith.mulf %69, %0 : vector<64x128xf32>
    %71 = vector.broadcast %54 : vector<1x128xf32> to vector<64x128xf32>
    %72 = arith.addf %70, %71 : vector<64x128xf32>
    %73 = arith.addf %72, %62 : vector<64x128xf32>
    %cst_24 = arith.constant 0.000000e+00 : f32
    %74 = vector.broadcast %cst_24 : f32 to vector<64x128xf32>
    %75 = arith.maximumf %73, %74 : vector<64x128xf32>
    %c0_25 = arith.constant 0 : index
    %c0_26 = arith.constant 0 : index
    %76 = vector.load %arg4[%c0_25, %c0_26] : memref<64x128xf32, #tpu.memory_space<vmem>>, vector<64x128xf32>
    tpu.vector_store %arg4[%c0_25, %c0_26], %75 {strides = array<i32>} : memref<64x128xf32, #tpu.memory_space<vmem>>, vector<64x128xf32>,
    return
  }
  func.func @transform_0(%arg0: i32) -> (i32, i32) {
    %c0_i32 = arith.constant 0 : i32
    %c0_i32_0 = arith.constant 0 : i32
    return %arg0, %c0_i32 : i32, i32
  }
  func.func @transform_1(%arg0: i32) -> (i32, i32, i32) {
    %c0_i32 = arith.constant 0 : i32
    %c0_i32_0 = arith.constant 0 : i32
    %c0_i32_1 = arith.constant 0 : i32
    %c0_i32_2 = arith.constant 0 : i32
    return %c0_i32, %c0_i32_0, %c0_i32_1 : i32, i32, i32
  }
  func.func @transform_2(%arg0: i32) -> (i32, i32, i32) {
    %c0_i32 = arith.constant 0 : i32
    %c0_i32_0 = arith.constant 0 : i32
    %c0_i32_1 = arith.constant 0 : i32
    %c0_i32_2 = arith.constant 0 : i32
    return %c0_i32, %c0_i32_0, %c0_i32_1 : i32, i32, i32
  }
  func.func @transform_3(%arg0: i32) -> (i32, i32) {
    %c0_i32 = arith.constant 0 : i32
    %c0_i32_0 = arith.constant 0 : i32
    return %arg0, %c0_i32 : i32, i32
  }
}

</mosaic_0001>

<llo_original>
// kernel: tpu_custom_call.1
$region0: #{tpu_custom_call.1}
  #allocation0 [shape = 'u32[]', space=smem, size = 0x4, offset = 0x4, fixed_abs, tag = 'smem constant byte address 0x4 - core index']
  #allocation1 [shape = 'u32[144,128]{1,0:T(1,128)}', space=vmem, size = 0x12000, scoped, tag = 'internal scratch']
  %s0 = inlined_call_operand.hbm [shape: f32[128,128], index: 0, kind: input, shape index: {}]
  %s1 = inlined_call_operand.hbm [shape: bf16[3,128,128], index: 1, kind: input, shape index: {}]
  %s2 = inlined_call_operand.hbm [shape: f32[3,4,128], index: 2, kind: input, shape index: {}]
  %s3 = inlined_call_operand.hbm [shape: f32[128,128], index: 3, kind: output, shape index: {}]
  %s4 = sld [smem:[#allocation0]]
  $region57: #{tpu_custom_call.1} parent=0
    _
  %s6 = ssub.s32 1, %s4
  %s7 = scalar_select 0, %s6, %s4
  $region1: #{tpu_custom_call.1} parent=0
    #allocation2 [shape = 'u8[65536]{0}', space=vmem, size = 0x10000, scoped, tag = 'input window, operand 0']
    #allocation3 [shape = 's32[2]{0}', space=sflag, size = 0x8, scoped, tag = 'scoped memory for tpu_custom_call.1']
    #allocation4 [shape = 's32[2]{0}', space=sflag, size = 0x8, scoped, tag = 'scoped memory for tpu_custom_call.1']
    #allocation5 [shape = 'u8[98304]{0}', space=vmem, size = 0x18000, scoped, tag = 'input window, operand 1, single buffered']
    #allocation6 [shape = 's32[1]{0}', space=sflag, size = 0x4, scoped, tag = 'scoped memory for tpu_custom_call.1']
    #allocation7 [shape = 'u8[6144]{0}', space=vmem, size = 0x1800, scoped, tag = 'input window, operand 2, single buffered']
    #allocation8 [shape = 'u8[65536]{0}', space=vmem, size = 0x10000, scoped, tag = 'output window, operand 0']
    %8 = vsyncpa [#allocation3], 0
    %s9 = scalar_lea.sflag [#allocation3], 1
    %10 = vsyncpa %s9, 0
    %11 = vsyncpa [#allocation6], 0
    %12 = vsyncpa [#allocation4], 0
    %s13 = scalar_lea.sflag [#allocation4], 1
    %14 = vsyncpa %s13, 0
    loop: start=0, step=1, limit=4
    $region2: #{tpu_custom_call.1} parent=1 // loop_pre_header
      _
    $region3: #{tpu_custom_call.1} parent=1 // loop_header
      %s16 = sphi 0, %s20
      %p17 = scmp.ge.s32.totalorder %s16, 4
      %s26 = sphi 0, %s28
      %s29 = sphi 0, %s26
      %s30 = sphi 0, %s29
      %s46 = sphi 0, %s30
      %s50 = sphi 0, %s50
      %s52 = sphi 0, %s50
      %s53 = sphi 0, %s52
      %s67 = sphi 0, %s53
      %s71 = sphi 0, %s71
      %s73 = sphi 0, %s71
      %s74 = sphi 0, %s73
      %s88 = sphi 0, %s74
      %s94 = sphi 0, %s96
      %s97 = sphi 0, %s94
      %s98 = sphi 0, %s97
      %s114 = sphi 0, %s98
    $region4: #{tpu_custom_call.1} parent=1 // loop_header_branch
      %19 = sbr.rel (%p17) target = $region8
    $region5: #{tpu_custom_call.1} parent=1 // loop_body
      %s21 = ssub.s32 %s16, 1
      %s22 = ssub.s32 %s16, 2
      %s23 = sadd.s32 %s16, 1
      %s24 = ssub.s32 %s16, %s23
      %p25 = scmp.eq.s32.totalorder %s24, 0
      %s27 = sadd.s32 %s26, 1
      %s28 = scalar_select %p25, %s26, %s27
      %p31 = pneg %p25
      %p32 = scmp.eq.s32.totalorder %s16, 1
      %p33 = por %p31, %p32
      %p34 = scmp.ne.s32.totalorder %s26, %s29
      %p35 = scmp.eq.s32.totalorder %s16, 0
      %p36 = por %p34, %p35
      %p37 = scmp.ne.s32.totalorder %s26, %s29
      %p38 = scmp.eq.s32.totalorder %s21, 1
      %p39 = por %p37, %p38
      %p40 = scmp.ne.s32.totalorder %s29, %s30
      %p41 = scmp.eq.s32.totalorder %s21, 0
      %p42 = por %p40, %p41
      %p43 = scmp.ne.s32.totalorder %s29, %s30
      %p44 = scmp.eq.s32.totalorder %s22, 1
      %p45 = por %p43, %p44
      %p47 = scmp.ne.s32.totalorder %s30, %s46
      %p48 = scmp.eq.s32.totalorder %s22, 0
      %p49 = por %p47, %p48
      %s51 = sadd.s32 %s50, 1
      %p54 = scmp.eq.s32.totalorder %s16, 1
      %p55 = scmp.ne.s32.totalorder %s50, %s52
      %p56 = scmp.eq.s32.totalorder %s16, 0
      %p57 = por %p55, %p56
      %p58 = scmp.ne.s32.totalorder %s50, %s52
      %p59 = scmp.eq.s32.totalorder %s21, 1
      %p60 = por %p58, %p59
      %p61 = scmp.ne.s32.totalorder %s52, %s53
      %p62 = scmp.eq.s32.totalorder %s21, 0
      %p63 = por %p61, %p62
      %p64 = scmp.ne.s32.totalorder %s52, %s53
      %p65 = scmp.eq.s32.totalorder %s22, 1
      %p66 = por %p64, %p65
      %p68 = scmp.ne.s32.totalorder %s53, %s67
      %p69 = scmp.eq.s32.totalorder %s22, 0
      %p70 = por %p68, %p69
      %s72 = sadd.s32 %s71, 1
      %p75 = scmp.eq.s32.totalorder %s16, 1
      %p76 = scmp.ne.s32.totalorder %s71, %s73
      %p77 = scmp.eq.s32.totalorder %s16, 0
      %p78 = por %p76, %p77
      %p79 = scmp.ne.s32.totalorder %s71, %s73
      %p80 = scmp.eq.s32.totalorder %s21, 1
      %p81 = por %p79, %p80
      %p82 = scmp.ne.s32.totalorder %s73, %s74
      %p83 = scmp.eq.s32.totalorder %s21, 0
      %p84 = por %p82, %p83
      %p85 = scmp.ne.s32.totalorder %s73, %s74
      %p86 = scmp.eq.s32.totalorder %s22, 1
      %p87 = por %p85, %p86
      %p89 = scmp.ne.s32.totalorder %s74, %s88
      %p90 = scmp.eq.s32.totalorder %s22, 0
      %p91 = por %p89, %p90
      %s92 = ssub.s32 %s16, %s23
      %p93 = scmp.eq.s32.totalorder %s92, 0
      %s95 = sadd.s32 %s94, 1
      %s96 = scalar_select %p93, %s94, %s95
      %p99 = pneg %p93
      %p100 = scmp.eq.s32.totalorder %s16, 1
      %p101 = por %p99, %p100
      %p102 = scmp.ne.s32.totalorder %s94, %s97
      %p103 = scmp.eq.s32.totalorder %s16, 0
      %p104 = por %p102, %p103
      %p105 = scmp.ne.s32.totalorder %s94, %s97
      %p106 = scmp.eq.s32.totalorder %s21, 1
      %p107 = por %p105, %p106
      %p108 = scmp.ne.s32.totalorder %s97, %s98
      %p109 = scmp.eq.s32.totalorder %s21, 0
      %p110 = por %p108, %p109
      %p111 = scmp.ne.s32.totalorder %s97, %s98
      %p112 = scmp.eq.s32.totalorder %s22, 1
      %p113 = por %p111, %p112
      %p115 = scmp.ne.s32.totalorder %s98, %s114
      %p116 = scmp.eq.s32.totalorder %s22, 0
      %p117 = por %p115, %p116
      %p118 = scmp.le.s32.totalorder 1, %s16
      %p119 = scmp.lt.s32.totalorder %s16, 3
      %p120 = pnand %p118, %p119
      %p121 = pneg %p120
      // Predicated region
      $region9: #{tpu_custom_call.1} parent=5 // pred_check
        _
      $region10: #{tpu_custom_call.1} parent=5 // pred_check_branch
        %123 = sbr.rel (%p120) target = $region12
      $region11: #{tpu_custom_call.1} parent=5 // pred_region
        %s124 = ssub.s32 %s16, 1
        // Predicated region
        $region13: #{tpu_custom_call.1} parent=11 // pred_check
          %p125 = pneg %p63
        $region14: #{tpu_custom_call.1} parent=11 // pred_check_branch
          %127 = sbr.rel (%p125) target = $region16
        $region15: #{tpu_custom_call.1} parent=11 // pred_region
          %s129 = ssub.s32 3072, 3072
          %130 = vsyncadd [#allocation6], %s129
          %s131 = sshll.u32 [#allocation5], 4
          %s132 = int_to_ptr.vmem [resolvable:$true] %s131
          %137 = dma.hbm_to_vmem [thread:$0]  %s1, 3072, %s132, [#allocation6], 64, 64, 4
        $region16: #{tpu_custom_call.1} parent=11 // pred_fallthru
          _
        // Predicated region
        $region17: #{tpu_custom_call.1} parent=11 // pred_check
          %p138 = pneg %p84
        $region18: #{tpu_custom_call.1} parent=11 // pred_check_branch
          %140 = sbr.rel (%p138) target = $region20
        $region19: #{tpu_custom_call.1} parent=11 // pred_region
          %s142 = ssub.s32 192, 192
          %143 = vsyncadd [#allocation6], %s142
          %s144 = sshll.u32 [#allocation7], 4
          %s145 = int_to_ptr.vmem [resolvable:$true] %s144
          %150 = dma.hbm_to_vmem [thread:$0]  %s2, 192, %s145, [#allocation6], 64, 64, 4
        $region20: #{tpu_custom_call.1} parent=11 // pred_fallthru
          _
      $region12: #{tpu_custom_call.1} parent=5 // pred_fallthru
        _
      %p151 = scmp.lt.s32.totalorder %s16, 2
      // Predicated region
      $region21: #{tpu_custom_call.1} parent=5 // pred_check
        %p152 = pneg %p151
      $region22: #{tpu_custom_call.1} parent=5 // pred_check_branch
        %154 = sbr.rel (%p152) target = $region24
      $region23: #{tpu_custom_call.1} parent=5 // pred_region
        // Predicated region
        $region25: #{tpu_custom_call.1} parent=23 // pred_check
          %p155 = pneg %p36
        $region26: #{tpu_custom_call.1} parent=23 // pred_check_branch
          %157 = sbr.rel (%p155) target = $region28
        $region27: #{tpu_custom_call.1} parent=23 // pred_region
          %s158 = sand.u32 %s26, 1
          %s159 = scalar_lea.sflag [#allocation3], %s158
          %s160 = sand.u32 %s26, 1
          %s161 = smul.addr %s160, 64
          %s162 = scalar_lea.vmem [#allocation2], %s161
          %s163 = smul.u32 8, %s16
          %s165 = ssub.s32 1024, 1024
          %166 = vsyncadd %s159, %s165
          %s167 = smul.addr %s163, 128
          %s168 = scalar_lea.hbm %s0, %s167
          %s169 = sshll.u32 %s162, 4
          %s170 = int_to_ptr.vmem [resolvable:$true] %s169
          %175 = dma.hbm_to_vmem [thread:$0]  %s168, 1024, %s170, %s159, 128, 128, 8
        $region28: #{tpu_custom_call.1} parent=23 // pred_fallthru
          _
      $region24: #{tpu_custom_call.1} parent=5 // pred_fallthru
        _
      %p176 = scmp.le.s32.totalorder 1, %s16
      %p177 = scmp.lt.s32.totalorder %s16, 3
      %p178 = pnand %p176, %p177
      %p179 = pneg %p178
      // Predicated region
      $region29: #{tpu_custom_call.1} parent=5 // pred_check
        _
      $region30: #{tpu_custom_call.1} parent=5 // pred_check_branch
        %181 = sbr.rel (%p178) target = $region32
      $region31: #{tpu_custom_call.1} parent=5 // pred_region
        %s182 = ssub.s32 %s16, 1
        %s183 = sand.u32 %s29, 1
        %s184 = scalar_lea.sflag [#allocation3], %s183
        %s185 = sand.u32 %s29, 1
        %s186 = smul.addr %s185, 64
        %s187 = scalar_lea.vmem [#allocation2], %s186
        // Predicated region
        $region33: #{tpu_custom_call.1} parent=31 // pred_check
          %p188 = pneg %p42
        $region34: #{tpu_custom_call.1} parent=31 // pred_check_branch
          %190 = sbr.rel (%p188) target = $region36
        $region35: #{tpu_custom_call.1} parent=31 // pred_region
          %191 = dma.done %s184, 1024
        $region36: #{tpu_custom_call.1} parent=31 // pred_fallthru
          _
        // Predicated region
        $region37: #{tpu_custom_call.1} parent=31 // pred_check
          %p192 = pneg %p63
        $region38: #{tpu_custom_call.1} parent=31 // pred_check_branch
          %194 = sbr.rel (%p192) target = $region40
        $region39: #{tpu_custom_call.1} parent=31 // pred_region
          %195 = dma.done [#allocation6], 3072
        $region40: #{tpu_custom_call.1} parent=31 // pred_fallthru
          _
        // Predicated region
        $region41: #{tpu_custom_call.1} parent=31 // pred_check
          %p196 = pneg %p84
        $region42: #{tpu_custom_call.1} parent=31 // pred_check_branch
          %198 = sbr.rel (%p196) target = $region44
        $region43: #{tpu_custom_call.1} parent=31 // pred_region
          %199 = dma.done [#allocation6], 192
        $region44: #{tpu_custom_call.1} parent=31 // pred_fallthru
          _
        %s200 = sand.u32 %s29, 1
        %s201 = scalar_lea.sflag [#allocation3], %s200
        %s202 = sand.u32 %s29, 1
        %s203 = smul.addr %s202, 64
        %s204 = scalar_lea.vmem [#allocation2], %s203
        %p205 = pneg %p42
        %p206 = pneg %p39
        %p207 = pneg %p63
        %p208 = pneg %p60
        %p209 = pneg %p84
        %p210 = pneg %p81
        %p211 = pneg %p110
        %p212 = pneg %p107
        %s213 = sand.u32 %s97, 1
        %s214 = scalar_lea.sflag [#allocation4], %s213
        %s215 = sand.u32 %s97, 1
        %s216 = smul.addr %s215, 64
        %s217 = scalar_lea.vmem [#allocation8], %s216
        %s218 = smul.u32 8, %s21
        %s219 = smul.u32 8, %s21
        %v221 = vld [vmem:[%s187] sm:$0xff]
        %v222 = vld [vmem:[%s187 + $0x8] sm:$0xff]
        %v223 = vld [vmem:[%s187 + $0x10] sm:$0xff]
        %v224 = vld [vmem:[%s187 + $0x18] sm:$0xff]
        %v225 = vld [vmem:[%s187 + $0x20] sm:$0xff]
        %v226 = vld [vmem:[%s187 + $0x28] sm:$0xff]
        %v227 = vld [vmem:[%s187 + $0x30] sm:$0xff]
        %v228 = vld [vmem:[%s187 + $0x38] sm:$0xff]
        %v229 = vld [vmem:[#allocation7] sm:$0xf]
        %v230 = vpack.c.bf16 %v222, %v221
        %v231 = vpack.c.bf16 %v224, %v223
        %v232 = vpack.c.bf16 %v226, %v225
        %v233 = vpack.c.bf16 %v228, %v227
        %v234 = vld [vmem:[#allocation5] sm:$0xf]
        %v235 = vld [vmem:[#allocation5 + $0x4] sm:$0xf]
        %v236 = vld [vmem:[#allocation5 + $0x8] sm:$0xf]
        %v237 = vld [vmem:[#allocation5 + $0xc] sm:$0xf]
        %v238 = vld [vmem:[#allocation5 + $0x10] sm:$0xf]
        %v239 = vld [vmem:[#allocation5 + $0x14] sm:$0xf]
        %v240 = vld [vmem:[#allocation5 + $0x18] sm:$0xf]
        %v241 = vld [vmem:[#allocation5 + $0x1c] sm:$0xf]
        %v242 = vld [vmem:[#allocation5 + $0x20] sm:$0xf]
        %v243 = vld [vmem:[#allocation5 + $0x24] sm:$0xf]
        %v244 = vld [vmem:[#allocation5 + $0x28] sm:$0xf]
        %v245 = vld [vmem:[#allocation5 + $0x2c] sm:$0xf]
        %v246 = vld [vmem:[#allocation5 + $0x30] sm:$0xf]
        %v247 = vld [vmem:[#allocation5 + $0x34] sm:$0xf]
        %v248 = vld [vmem:[#allocation5 + $0x38] sm:$0xf]
        %v249 = vld [vmem:[#allocation5 + $0x3c] sm:$0xf]
        %v250 = vlaneseq
        %v251 = vshrl.u32 %v250, 7
        %v252 = vsub.s32 0, %v251
        %v253 = vrot.slane %v229, %v252
        %v270 = vunpack.c.l.b16 %v234
        %v271 = vunpack.c.l.b16 %v235
        %v272 = vunpack.c.l.b16 %v236
        %v273 = vunpack.c.l.b16 %v237
        %v274 = vunpack.c.l.b16 %v238
        %v275 = vunpack.c.l.b16 %v239
        %v276 = vunpack.c.l.b16 %v240
        %v277 = vunpack.c.l.b16 %v241
        %v278 = vunpack.c.l.b16 %v242
        %v279 = vunpack.c.l.b16 %v243
        %v280 = vunpack.c.l.b16 %v244
        %v281 = vunpack.c.l.b16 %v245
        %v282 = vunpack.c.l.b16 %v246
        %v283 = vunpack.c.l.b16 %v247
        %v284 = vunpack.c.l.b16 %v248
        %v285 = vunpack.c.l.b16 %v249
        %v286 = vpack.c.b16 %v271, %v270
        %v287 = vpack.c.b16 %v273, %v272
        %v288 = vpack.c.b16 %v275, %v274
        %v289 = vpack.c.b16 %v277, %v276
        %v290 = vpack.c.b16 %v279, %v278
        %v291 = vpack.c.b16 %v281, %v280
        %v292 = vpack.c.b16 %v283, %v282
        %v293 = vpack.c.b16 %v285, %v284
        %302 = vmatprep.subr.bf16.mxu0 0
        %303 = vmatpush1.bf16.msra.mxu0 %v286
        %304 = vmatprep.subr.bf16.mxu0 0
        %305 = vmatpush1.bf16.msra.mxu0 %v287
        %306 = vmatprep.subr.bf16.mxu0 0
        %307 = vmatpush1.bf16.msra.mxu0 %v288
        %308 = vmatprep.subr.bf16.mxu0 0
        %309 = vmatpush1.bf16.msra.mxu0 %v289
        %310 = vmatprep.subr.bf16.mxu0 0
        %311 = vmatpush1.bf16.msra.mxu0 %v290
        %312 = vmatprep.subr.bf16.mxu0 0
        %313 = vmatpush1.bf16.msra.mxu0 %v291
        %314 = vmatprep.subr.bf16.mxu0 0
        %315 = vmatpush1.bf16.msra.mxu0 %v292
        %316 = vmatprep.subr.bf16.mxu0 0
        %317 = vmatpush1.bf16.msra.mxu0 %v293
        %318 = vmatprep.subr.bf16.mxu0 0
        %319 = vmatpush1.bf16.msra.mxu0 0
        %320 = vmatprep.subr.bf16.mxu0 0
        %321 = vmatpush1.bf16.msra.mxu0 0
        %322 = vmatprep.subr.bf16.mxu0 0
        %323 = vmatpush1.bf16.msra.mxu0 0
        %324 = vmatprep.subr.bf16.mxu0 0
        %325 = vmatpush1.bf16.msra.mxu0 0
        %326 = vmatprep.subr.bf16.mxu0 0
        %327 = vmatpush1.bf16.msra.mxu0 0
        %328 = vmatprep.subr.bf16.mxu0 0
        %329 = vmatpush1.bf16.msra.mxu0 0
        %330 = vmatprep.subr.bf16.mxu0 0
        %331 = vmatpush1.bf16.msra.mxu0 0
        %332 = vmatprep.subr.bf16.mxu0 0
        %333 = vmatpush1.bf16.msra.mxu0 0
        %334 = vmatprep.mubr.bf16.mxu0 0
        %335 = vmatmul.mubr.bf16.gmra.mrb[0].mxu0 %v230
        %v336 = vpop.f32.mrb[0].mxu0
        %v337 = vadd.f32 %v253, %v336
        %v338 = vpop.f32.mrb[0].mxu0
        %v339 = vpop.f32.mrb[0].mxu0
        %v340 = vadd.f32 %v253, %v339
        %v341 = vpop.f32.mrb[0].mxu0
        %342 = vmatprep.mubr.bf16.mxu0 0
        %343 = vmatmul.mubr.bf16.gmra.mrb[0].mxu0 %v231
        %v344 = vpop.f32.mrb[0].mxu0
        %v345 = vadd.f32 %v253, %v344
        %v346 = vpop.f32.mrb[0].mxu0
        %v347 = vpop.f32.mrb[0].mxu0
        %v348 = vadd.f32 %v253, %v347
        %v349 = vpop.f32.mrb[0].mxu0
        %350 = vmatprep.mubr.bf16.mxu0 0
        %351 = vmatmul.mubr.bf16.gmra.mrb[0].mxu0 %v232
        %v352 = vpop.f32.mrb[0].mxu0
        %v353 = vadd.f32 %v253, %v352
        %v354 = vpop.f32.mrb[0].mxu0
        %v355 = vpop.f32.mrb[0].mxu0
        %v356 = vadd.f32 %v253, %v355
        %v357 = vpop.f32.mrb[0].mxu0
        %358 = vmatprep.mubr.bf16.mxu0 0
        %359 = vmatmul.mubr.bf16.gmra.mrb[0].mxu0 %v233
        %v360 = vpop.f32.mrb[0].mxu0
        %v361 = vadd.f32 %v253, %v360
        %v362 = vpop.f32.mrb[0].mxu0
        %v363 = vpop.f32.mrb[0].mxu0
        %v364 = vadd.f32 %v253, %v363
        %v365 = vpop.f32.mrb[0].mxu0
        %366 = vdwg.mxu0
        %v367 = vlaneseq
        %v368 = vshrl.u32 %v367, 7
        %v369 = vsub.s32 2, %v368
        %v370 = vrot.slane %v229, %v369
        %v371 = vmul.f32 %v221, %v370
        %v372 = vmul.f32 %v222, %v370
        %v373 = vmul.f32 %v223, %v370
        %v374 = vmul.f32 %v224, %v370
        %v375 = vmul.f32 %v225, %v370
        %v376 = vmul.f32 %v226, %v370
        %v377 = vmul.f32 %v227, %v370
        %v378 = vmul.f32 %v228, %v370
        %379 = vadd.xlane.f32.xlu0 %v371
        %v380 = vpop.xlane.xlu0 %379
        %381 = vadd.xlane.f32.xlu0 %v372
        %v382 = vpop.xlane.xlu0 %381
        %383 = vadd.xlane.f32.xlu0 %v373
        %v384 = vpop.xlane.xlu0 %383
        %385 = vadd.xlane.f32.xlu0 %v374
        %v386 = vpop.xlane.xlu0 %385
        %387 = vadd.xlane.f32.xlu0 %v375
        %v388 = vpop.xlane.xlu0 %387
        %389 = vadd.xlane.f32.xlu0 %v376
        %v390 = vpop.xlane.xlu0 %389
        %391 = vadd.xlane.f32.xlu0 %v377
        %v392 = vpop.xlane.xlu0 %391
        %393 = vadd.xlane.f32.xlu0 %v378
        %v394 = vpop.xlane.xlu0 %393
        %v395 = vlaneseq
        %v396 = vshrl.u32 %v395, 7
        %v397 = vsub.s32 3, %v396
        %v398 = vrot.slane %v229, %v397
        %v399 = vadd.f32 %v380, %v398
        %v400 = vadd.f32 %v382, %v398
        %v401 = vadd.f32 %v384, %v398
        %v402 = vadd.f32 %v386, %v398
        %v403 = vadd.f32 %v388, %v398
        %v404 = vadd.f32 %v390, %v398
        %v405 = vadd.f32 %v392, %v398
        %v406 = vadd.f32 %v394, %v398
        %v407 = vmul.f32 %v399, %v221
        %v408 = vmul.f32 %v400, %v222
        %v409 = vmul.f32 %v401, %v223
        %v410 = vmul.f32 %v402, %v224
        %v411 = vmul.f32 %v403, %v225
        %v412 = vmul.f32 %v404, %v226
        %v413 = vmul.f32 %v405, %v227
        %v414 = vmul.f32 %v406, %v228
        %v415 = vlaneseq
        %v416 = vshrl.u32 %v415, 7
        %v417 = vsub.s32 1, %v416
        %v418 = vrot.slane %v229, %v417
        %v419 = vadd.f32 %v407, %v418
        %v420 = vadd.f32 %v408, %v418
        %v421 = vadd.f32 %v409, %v418
        %v422 = vadd.f32 %v410, %v418
        %v423 = vadd.f32 %v411, %v418
        %v424 = vadd.f32 %v412, %v418
        %v425 = vadd.f32 %v413, %v418
        %v426 = vadd.f32 %v414, %v418
        %v427 = vadd.f32 %v419, %v337
        %v428 = vadd.f32 %v420, %v340
        %v429 = vadd.f32 %v421, %v345
        %v430 = vadd.f32 %v422, %v348
        %v431 = vadd.f32 %v423, %v353
        %v432 = vadd.f32 %v424, %v356
        %v433 = vadd.f32 %v425, %v361
        %v434 = vadd.f32 %v426, %v364
        %v435 = vmax.f32 %v427, 0.0
        %v436 = vmax.f32 %v428, 0.0
        %v437 = vmax.f32 %v429, 0.0
        %v438 = vmax.f32 %v430, 0.0
        %v439 = vmax.f32 %v431, 0.0
        %v440 = vmax.f32 %v432, 0.0
        %v441 = vmax.f32 %v433, 0.0
        %v442 = vmax.f32 %v434, 0.0
        %s443 = scalar_lea.vmem [#allocation7], 4
        %v444 = vld [vmem:[%s443] sm:$0xf]
        %v445 = vpack.c.bf16 %v436, %v435
        %v446 = vpack.c.bf16 %v438, %v437
        %v447 = vpack.c.bf16 %v440, %v439
        %v448 = vpack.c.bf16 %v442, %v441
        %s449 = scalar_lea.vmem [#allocation5], 64
        %v450 = vld [vmem:[%s449] sm:$0xf]
        %v451 = vld [vmem:[%s449 + $0x4] sm:$0xf]
        %v452 = vld [vmem:[%s449 + $0x8] sm:$0xf]
        %v453 = vld [vmem:[%s449 + $0xc] sm:$0xf]
        %v454 = vld [vmem:[%s449 + $0x10] sm:$0xf]
        %v455 = vld [vmem:[%s449 + $0x14] sm:$0xf]
        %v456 = vld [vmem:[%s449 + $0x18] sm:$0xf]
        %v457 = vld [vmem:[%s449 + $0x1c] sm:$0xf]
        %v458 = vld [vmem:[%s449 + $0x20] sm:$0xf]
        %v459 = vld [vmem:[%s449 + $0x24] sm:$0xf]
        %v460 = vld [vmem:[%s449 + $0x28] sm:$0xf]
        %v461 = vld [vmem:[%s449 + $0x2c] sm:$0xf]
        %v462 = vld [vmem:[%s449 + $0x30] sm:$0xf]
        %v463 = vld [vmem:[%s449 + $0x34] sm:$0xf]
        %v464 = vld [vmem:[%s449 + $0x38] sm:$0xf]
        %v465 = vld [vmem:[%s449 + $0x3c] sm:$0xf]
        %v466 = vlaneseq
        %v467 = vshrl.u32 %v466, 7
        %v468 = vsub.s32 0, %v467
        %v469 = vrot.slane %v444, %v468
        %v486 = vunpack.c.l.b16 %v450
        %v487 = vunpack.c.l.b16 %v451
        %v488 = vunpack.c.l.b16 %v452
        %v489 = vunpack.c.l.b16 %v453
        %v490 = vunpack.c.l.b16 %v454
        %v491 = vunpack.c.l.b16 %v455
        %v492 = vunpack.c.l.b16 %v456
        %v493 = vunpack.c.l.b16 %v457
        %v494 = vunpack.c.l.b16 %v458
        %v495 = vunpack.c.l.b16 %v459
        %v496 = vunpack.c.l.b16 %v460
        %v497 = vunpack.c.l.b16 %v461
        %v498 = vunpack.c.l.b16 %v462
        %v499 = vunpack.c.l.b16 %v463
        %v500 = vunpack.c.l.b16 %v464
        %v501 = vunpack.c.l.b16 %v465
        %v502 = vpack.c.b16 %v487, %v486
        %v503 = vpack.c.b16 %v489, %v488
        %v504 = vpack.c.b16 %v491, %v490
        %v505 = vpack.c.b16 %v493, %v492
        %v506 = vpack.c.b16 %v495, %v494
        %v507 = vpack.c.b16 %v497, %v496
        %v508 = vpack.c.b16 %v499, %v498
        %v509 = vpack.c.b16 %v501, %v500
        %518 = vmatprep.subr.bf16.mxu0 0
        %519 = vmatpush1.bf16.msra.mxu0 %v502
        %520 = vmatprep.subr.bf16.mxu0 0
        %521 = vmatpush1.bf16.msra.mxu0 %v503
        %522 = vmatprep.subr.bf16.mxu0 0
        %523 = vmatpush1.bf16.msra.mxu0 %v504
        %524 = vmatprep.subr.bf16.mxu0 0
        %525 = vmatpush1.bf16.msra.mxu0 %v505
        %526 = vmatprep.subr.bf16.mxu0 0
        %527 = vmatpush1.bf16.msra.mxu0 %v506
        %528 = vmatprep.subr.bf16.mxu0 0
        %529 = vmatpush1.bf16.msra.mxu0 %v507
        %530 = vmatprep.subr.bf16.mxu0 0
        %531 = vmatpush1.bf16.msra.mxu0 %v508
        %532 = vmatprep.subr.bf16.mxu0 0
        %533 = vmatpush1.bf16.msra.mxu0 %v509
        %534 = vmatprep.subr.bf16.mxu0 0
        %535 = vmatpush1.bf16.msra.mxu0 0
        %536 = vmatprep.subr.bf16.mxu0 0
        %537 = vmatpush1.bf16.msra.mxu0 0
        %538 = vmatprep.subr.bf16.mxu0 0
        %539 = vmatpush1.bf16.msra.mxu0 0
        %540 = vmatprep.subr.bf16.mxu0 0
        %541 = vmatpush1.bf16.msra.mxu0 0
        %542 = vmatprep.subr.bf16.mxu0 0
        %543 = vmatpush1.bf16.msra.mxu0 0
        %544 = vmatprep.subr.bf16.mxu0 0
        %545 = vmatpush1.bf16.msra.mxu0 0
        %546 = vmatprep.subr.bf16.mxu0 0
        %547 = vmatpush1.bf16.msra.mxu0 0
        %548 = vmatprep.subr.bf16.mxu0 0
        %549 = vmatpush1.bf16.msra.mxu0 0
        %550 = vmatprep.mubr.bf16.mxu0 0
        %551 = vmatmul.mubr.bf16.gmra.mrb[0].mxu0 %v445
        %v552 = vpop.f32.mrb[0].mxu0
        %v553 = vadd.f32 %v469, %v552
        %v554 = vpop.f32.mrb[0].mxu0
        %v555 = vpop.f32.mrb[0].mxu0
        %v556 = vadd.f32 %v469, %v555
        %v557 = vpop.f32.mrb[0].mxu0
        %558 = vmatprep.mubr.bf16.mxu0 0
        %559 = vmatmul.mubr.bf16.gmra.mrb[0].mxu0 %v446
        %v560 = vpop.f32.mrb[0].mxu0
        %v561 = vadd.f32 %v469, %v560
        %v562 = vpop.f32.mrb[0].mxu0
        %v563 = vpop.f32.mrb[0].mxu0
        %v564 = vadd.f32 %v469, %v563
        %v565 = vpop.f32.mrb[0].mxu0
        %566 = vmatprep.mubr.bf16.mxu0 0
        %567 = vmatmul.mubr.bf16.gmra.mrb[0].mxu0 %v447
        %v568 = vpop.f32.mrb[0].mxu0
        %v569 = vadd.f32 %v469, %v568
        %v570 = vpop.f32.mrb[0].mxu0
        %v571 = vpop.f32.mrb[0].mxu0
        %v572 = vadd.f32 %v469, %v571
        %v573 = vpop.f32.mrb[0].mxu0
        %574 = vmatprep.mubr.bf16.mxu0 0
        %575 = vmatmul.mubr.bf16.gmra.mrb[0].mxu0 %v448
        %v576 = vpop.f32.mrb[0].mxu0
        %v577 = vadd.f32 %v469, %v576
        %v578 = vpop.f32.mrb[0].mxu0
        %v579 = vpop.f32.mrb[0].mxu0
        %v580 = vadd.f32 %v469, %v579
        %v581 = vpop.f32.mrb[0].mxu0
        %582 = vdwg.mxu0
        %v583 = vlaneseq
        %v584 = vshrl.u32 %v583, 7
        %v585 = vsub.s32 2, %v584
        %v586 = vrot.slane %v444, %v585
        %v587 = vmul.f32 %v435, %v586
        %v588 = vmul.f32 %v436, %v586
        %v589 = vmul.f32 %v437, %v586
        %v590 = vmul.f32 %v438, %v586
        %v591 = vmul.f32 %v439, %v586
        %v592 = vmul.f32 %v440, %v586
        %v593 = vmul.f32 %v441, %v586
        %v594 = vmul.f32 %v442, %v586
        %595 = vadd.xlane.f32.xlu0 %v587
        %v596 = vpop.xlane.xlu0 %595
        %597 = vadd.xlane.f32.xlu0 %v588
        %v598 = vpop.xlane.xlu0 %597
        %599 = vadd.xlane.f32.xlu0 %v589
        %v600 = vpop.xlane.xlu0 %599
        %601 = vadd.xlane.f32.xlu0 %v590
        %v602 = vpop.xlane.xlu0 %601
        %603 = vadd.xlane.f32.xlu0 %v591
        %v604 = vpop.xlane.xlu0 %603
        %605 = vadd.xlane.f32.xlu0 %v592
        %v606 = vpop.xlane.xlu0 %605
        %607 = vadd.xlane.f32.xlu0 %v593
        %v608 = vpop.xlane.xlu0 %607
        %609 = vadd.xlane.f32.xlu0 %v594
        %v610 = vpop.xlane.xlu0 %609
        %v611 = vlaneseq
        %v612 = vshrl.u32 %v611, 7
        %v613 = vsub.s32 3, %v612
        %v614 = vrot.slane %v444, %v613
        %v615 = vadd.f32 %v596, %v614
        %v616 = vadd.f32 %v598, %v614
        %v617 = vadd.f32 %v600, %v614
        %v618 = vadd.f32 %v602, %v614
        %v619 = vadd.f32 %v604, %v614
        %v620 = vadd.f32 %v606, %v614
        %v621 = vadd.f32 %v608, %v614
        %v622 = vadd.f32 %v610, %v614
        %v623 = vmul.f32 %v615, %v221
        %v624 = vmul.f32 %v616, %v222
        %v625 = vmul.f32 %v617, %v223
        %v626 = vmul.f32 %v618, %v224
        %v627 = vmul.f32 %v619, %v225
        %v628 = vmul.f32 %v620, %v226
        %v629 = vmul.f32 %v621, %v227
        %v630 = vmul.f32 %v622, %v228
        %v631 = vlaneseq
        %v632 = vshrl.u32 %v631, 7
        %v633 = vsub.s32 1, %v632
        %v634 = vrot.slane %v444, %v633
        %v635 = vadd.f32 %v623, %v634
        %v636 = vadd.f32 %v624, %v634
        %v637 = vadd.f32 %v625, %v634
        %v638 = vadd.f32 %v626, %v634
        %v639 = vadd.f32 %v627, %v634
        %v640 = vadd.f32 %v628, %v634
        %v641 = vadd.f32 %v629, %v634
        %v642 = vadd.f32 %v630, %v634
        %v643 = vadd.f32 %v635, %v553
        %v644 = vadd.f32 %v636, %v556
        %v645 = vadd.f32 %v637, %v561
        %v646 = vadd.f32 %v638, %v564
        %v647 = vadd.f32 %v639, %v569
        %v648 = vadd.f32 %v640, %v572
        %v649 = vadd.f32 %v641, %v577
        %v650 = vadd.f32 %v642, %v580
        %v651 = vmax.f32 %v643, 0.0
        %v652 = vmax.f32 %v644, 0.0
        %v653 = vmax.f32 %v645, 0.0
        %v654 = vmax.f32 %v646, 0.0
        %v655 = vmax.f32 %v647, 0.0
        %v656 = vmax.f32 %v648, 0.0
        %v657 = vmax.f32 %v649, 0.0
        %v658 = vmax.f32 %v650, 0.0
        %s659 = scalar_lea.vmem [#allocation7], 8
        %v660 = vld [vmem:[%s659] sm:$0xf]
        %v661 = vpack.c.bf16 %v652, %v651
        %v662 = vpack.c.bf16 %v654, %v653
        %v663 = vpack.c.bf16 %v656, %v655
        %v664 = vpack.c.bf16 %v658, %v657
        %s665 = scalar_lea.vmem [#allocation5], 128
        %v666 = vld [vmem:[%s665] sm:$0xf]
        %v667 = vld [vmem:[%s665 + $0x4] sm:$0xf]
        %v668 = vld [vmem:[%s665 + $0x8] sm:$0xf]
        %v669 = vld [vmem:[%s665 + $0xc] sm:$0xf]
        %v670 = vld [vmem:[%s665 + $0x10] sm:$0xf]
        %v671 = vld [vmem:[%s665 + $0x14] sm:$0xf]
        %v672 = vld [vmem:[%s665 + $0x18] sm:$0xf]
        %v673 = vld [vmem:[%s665 + $0x1c] sm:$0xf]
        %v674 = vld [vmem:[%s665 + $0x20] sm:$0xf]
        %v675 = vld [vmem:[%s665 + $0x24] sm:$0xf]
        %v676 = vld [vmem:[%s665 + $0x28] sm:$0xf]
        %v677 = vld [vmem:[%s665 + $0x2c] sm:$0xf]
        %v678 = vld [vmem:[%s665 + $0x30] sm:$0xf]
        %v679 = vld [vmem:[%s665 + $0x34] sm:$0xf]
        %v680 = vld [vmem:[%s665 + $0x38] sm:$0xf]
        %v681 = vld [vmem:[%s665 + $0x3c] sm:$0xf]
        %v682 = vlaneseq
        %v683 = vshrl.u32 %v682, 7
        %v684 = vsub.s32 0, %v683
        %v685 = vrot.slane %v660, %v684
        %v702 = vunpack.c.l.b16 %v666
        %v703 = vunpack.c.l.b16 %v667
        %v704 = vunpack.c.l.b16 %v668
        %v705 = vunpack.c.l.b16 %v669
        %v706 = vunpack.c.l.b16 %v670
        %v707 = vunpack.c.l.b16 %v671
        %v708 = vunpack.c.l.b16 %v672
        %v709 = vunpack.c.l.b16 %v673
        %v710 = vunpack.c.l.b16 %v674
        %v711 = vunpack.c.l.b16 %v675
        %v712 = vunpack.c.l.b16 %v676
        %v713 = vunpack.c.l.b16 %v677
        %v714 = vunpack.c.l.b16 %v678
        %v715 = vunpack.c.l.b16 %v679
        %v716 = vunpack.c.l.b16 %v680
        %v717 = vunpack.c.l.b16 %v681
        %v718 = vpack.c.b16 %v703, %v702
        %v719 = vpack.c.b16 %v705, %v704
        %v720 = vpack.c.b16 %v707, %v706
        %v721 = vpack.c.b16 %v709, %v708
        %v722 = vpack.c.b16 %v711, %v710
        %v723 = vpack.c.b16 %v713, %v712
        %v724 = vpack.c.b16 %v715, %v714
        %v725 = vpack.c.b16 %v717, %v716
        %734 = vmatprep.subr.bf16.mxu0 0
        %735 = vmatpush1.bf16.msra.mxu0 %v718
        %736 = vmatprep.subr.bf16.mxu0 0
        %737 = vmatpush1.bf16.msra.mxu0 %v719
        %738 = vmatprep.subr.bf16.mxu0 0
        %739 = vmatpush1.bf16.msra.mxu0 %v720
        %740 = vmatprep.subr.bf16.mxu0 0
        %741 = vmatpush1.bf16.msra.mxu0 %v721
        %742 = vmatprep.subr.bf16.mxu0 0
        %743 = vmatpush1.bf16.msra.mxu0 %v722
        %744 = vmatprep.subr.bf16.mxu0 0
        %745 = vmatpush1.bf16.msra.mxu0 %v723
        %746 = vmatprep.subr.bf16.mxu0 0
        %747 = vmatpush1.bf16.msra.mxu0 %v724
        %748 = vmatprep.subr.bf16.mxu0 0
        %749 = vmatpush1.bf16.msra.mxu0 %v725
        %750 = vmatprep.subr.bf16.mxu0 0
        %751 = vmatpush1.bf16.msra.mxu0 0
        %752 = vmatprep.subr.bf16.mxu0 0
        %753 = vmatpush1.bf16.msra.mxu0 0
        %754 = vmatprep.subr.bf16.mxu0 0
        %755 = vmatpush1.bf16.msra.mxu0 0
        %756 = vmatprep.subr.bf16.mxu0 0
        %757 = vmatpush1.bf16.msra.mxu0 0
        %758 = vmatprep.subr.bf16.mxu0 0
        %759 = vmatpush1.bf16.msra.mxu0 0
        %760 = vmatprep.subr.bf16.mxu0 0
        %761 = vmatpush1.bf16.msra.mxu0 0
        %762 = vmatprep.subr.bf16.mxu0 0
        %763 = vmatpush1.bf16.msra.mxu0 0
        %764 = vmatprep.subr.bf16.mxu0 0
        %765 = vmatpush1.bf16.msra.mxu0 0
        %766 = vmatprep.mubr.bf16.mxu0 0
        %767 = vmatmul.mubr.bf16.gmra.mrb[0].mxu0 %v661
        %v768 = vpop.f32.mrb[0].mxu0
        %v769 = vadd.f32 %v685, %v768
        %v770 = vpop.f32.mrb[0].mxu0
        %v771 = vpop.f32.mrb[0].mxu0
        %v772 = vadd.f32 %v685, %v771
        %v773 = vpop.f32.mrb[0].mxu0
        %774 = vmatprep.mubr.bf16.mxu0 0
        %775 = vmatmul.mubr.bf16.gmra.mrb[0].mxu0 %v662
        %v776 = vpop.f32.mrb[0].mxu0
        %v777 = vadd.f32 %v685, %v776
        %v778 = vpop.f32.mrb[0].mxu0
        %v779 = vpop.f32.mrb[0].mxu0
        %v780 = vadd.f32 %v685, %v779
        %v781 = vpop.f32.mrb[0].mxu0
        %782 = vmatprep.mubr.bf16.mxu0 0
        %783 = vmatmul.mubr.bf16.gmra.mrb[0].mxu0 %v663
        %v784 = vpop.f32.mrb[0].mxu0
        %v785 = vadd.f32 %v685, %v784
        %v786 = vpop.f32.mrb[0].mxu0
        %v787 = vpop.f32.mrb[0].mxu0
        %v788 = vadd.f32 %v685, %v787
        %v789 = vpop.f32.mrb[0].mxu0
        %790 = vmatprep.mubr.bf16.mxu0 0
        %791 = vmatmul.mubr.bf16.gmra.mrb[0].mxu0 %v664
        %v792 = vpop.f32.mrb[0].mxu0
        %v793 = vadd.f32 %v685, %v792
        %v794 = vpop.f32.mrb[0].mxu0
        %v795 = vpop.f32.mrb[0].mxu0
        %v796 = vadd.f32 %v685, %v795
        %v797 = vpop.f32.mrb[0].mxu0
        %798 = vdwg.mxu0
        %v799 = vlaneseq
        %v800 = vshrl.u32 %v799, 7
        %v801 = vsub.s32 2, %v800
        %v802 = vrot.slane %v660, %v801
        %v803 = vmul.f32 %v651, %v802
        %v804 = vmul.f32 %v652, %v802
        %v805 = vmul.f32 %v653, %v802
        %v806 = vmul.f32 %v654, %v802
        %v807 = vmul.f32 %v655, %v802
        %v808 = vmul.f32 %v656, %v802
        %v809 = vmul.f32 %v657, %v802
        %v810 = vmul.f32 %v658, %v802
        %811 = vadd.xlane.f32.xlu0 %v803
        %v812 = vpop.xlane.xlu0 %811
        %813 = vadd.xlane.f32.xlu0 %v804
        %v814 = vpop.xlane.xlu0 %813
        %815 = vadd.xlane.f32.xlu0 %v805
        %v816 = vpop.xlane.xlu0 %815
        %817 = vadd.xlane.f32.xlu0 %v806
        %v818 = vpop.xlane.xlu0 %817
        %819 = vadd.xlane.f32.xlu0 %v807
        %v820 = vpop.xlane.xlu0 %819
        %821 = vadd.xlane.f32.xlu0 %v808
        %v822 = vpop.xlane.xlu0 %821
        %823 = vadd.xlane.f32.xlu0 %v809
        %v824 = vpop.xlane.xlu0 %823
        %825 = vadd.xlane.f32.xlu0 %v810
        %v826 = vpop.xlane.xlu0 %825
        %v827 = vlaneseq
        %v828 = vshrl.u32 %v827, 7
        %v829 = vsub.s32 3, %v828
        %v830 = vrot.slane %v660, %v829
        %v831 = vadd.f32 %v812, %v830
        %v832 = vadd.f32 %v814, %v830
        %v833 = vadd.f32 %v816, %v830
        %v834 = vadd.f32 %v818, %v830
        %v835 = vadd.f32 %v820, %v830
        %v836 = vadd.f32 %v822, %v830
        %v837 = vadd.f32 %v824, %v830
        %v838 = vadd.f32 %v826, %v830
        %v839 = vmul.f32 %v831, %v221
        %v840 = vmul.f32 %v832, %v222
        %v841 = vmul.f32 %v833, %v223
        %v842 = vmul.f32 %v834, %v224
        %v843 = vmul.f32 %v835, %v225
        %v844 = vmul.f32 %v836, %v226
        %v845 = vmul.f32 %v837, %v227
        %v846 = vmul.f32 %v838, %v228
        %v847 = vlaneseq
        %v848 = vshrl.u32 %v847, 7
        %v849 = vsub.s32 1, %v848
        %v850 = vrot.slane %v660, %v849
        %v851 = vadd.f32 %v839, %v850
        %v852 = vadd.f32 %v840, %v850
        %v853 = vadd.f32 %v841, %v850
        %v854 = vadd.f32 %v842, %v850
        %v855 = vadd.f32 %v843, %v850
        %v856 = vadd.f32 %v844, %v850
        %v857 = vadd.f32 %v845, %v850
        %v858 = vadd.f32 %v846, %v850
        %v859 = vadd.f32 %v851, %v769
        %v860 = vadd.f32 %v852, %v772
        %v861 = vadd.f32 %v853, %v777
        %v862 = vadd.f32 %v854, %v780
        %v863 = vadd.f32 %v855, %v785
        %v864 = vadd.f32 %v856, %v788
        %v865 = vadd.f32 %v857, %v793
        %v866 = vadd.f32 %v858, %v796
        %v867 = vmax.f32 %v859, 0.0
        %v868 = vmax.f32 %v860, 0.0
        %v869 = vmax.f32 %v861, 0.0
        %v870 = vmax.f32 %v862, 0.0
        %v871 = vmax.f32 %v863, 0.0
        %v872 = vmax.f32 %v864, 0.0
        %v873 = vmax.f32 %v865, 0.0
        %v874 = vmax.f32 %v866, 0.0
        %875 = vst [vmem:[%s217] sm:$0xff] %v867
        %876 = vst [vmem:[%s217 + $0x8] sm:$0xff] %v868
        %877 = vst [vmem:[%s217 + $0x10] sm:$0xff] %v869
        %878 = vst [vmem:[%s217 + $0x18] sm:$0xff] %v870
        %879 = vst [vmem:[%s217 + $0x20] sm:$0xff] %v871
        %880 = vst [vmem:[%s217 + $0x28] sm:$0xff] %v872
        %881 = vst [vmem:[%s217 + $0x30] sm:$0xff] %v873
        %882 = vst [vmem:[%s217 + $0x38] sm:$0xff] %v874
        %s883 = sand.u32 %s97, 1
        %s884 = scalar_lea.sflag [#allocation4], %s883
        %s885 = sand.u32 %s97, 1
        %s886 = smul.addr %s885, 64
        %s887 = scalar_lea.vmem [#allocation8], %s886
        // Predicated region
        $region45: #{tpu_custom_call.1} parent=31 // pred_check
          %p888 = pneg %p107
        $region46: #{tpu_custom_call.1} parent=31 // pred_check_branch
          %890 = sbr.rel (%p888) target = $region48
        $region47: #{tpu_custom_call.1} parent=31 // pred_region
          %s891 = smul.u32 8, %s21
          %s893 = ssub.s32 1024, 1024
          %894 = vsyncadd %s884, %s893
          %s895 = smul.addr %s891, 128
          %s896 = scalar_lea.hbm %s3, %s895
          %s897 = sshll.u32 %s887, 4
          %s898 = int_to_ptr.vmem [resolvable:$true] %s897
          %903 = dma.vmem_to_hbm [thread:$0]  %s898, 1024, %s896, %s884, 128, 128, 8
        $region48: #{tpu_custom_call.1} parent=31 // pred_fallthru
          _
      $region32: #{tpu_custom_call.1} parent=5 // pred_fallthru
        _
      %p904 = scmp.le.s32.totalorder 2, %s16
      // Predicated region
      $region49: #{tpu_custom_call.1} parent=5 // pred_check
        %p905 = pneg %p904
      $region50: #{tpu_custom_call.1} parent=5 // pred_check_branch
        %907 = sbr.rel (%p905) target = $region52
      $region51: #{tpu_custom_call.1} parent=5 // pred_region
        %s908 = ssub.s32 %s16, 2
        // Predicated region
        $region53: #{tpu_custom_call.1} parent=51 // pred_check
          %p909 = pneg %p113
        $region54: #{tpu_custom_call.1} parent=51 // pred_check_branch
          %911 = sbr.rel (%p909) target = $region56
        $region55: #{tpu_custom_call.1} parent=51 // pred_region
          %s912 = sand.u32 %s98, 1
          %s913 = scalar_lea.sflag [#allocation4], %s912
          %s914 = sand.u32 %s98, 1
          %s915 = smul.addr %s914, 64
          %s916 = scalar_lea.vmem [#allocation8], %s915
          %917 = dma.done %s913, 1024
        $region56: #{tpu_custom_call.1} parent=51 // pred_fallthru
          _
      $region52: #{tpu_custom_call.1} parent=5 // pred_fallthru
        _
    $region6: #{tpu_custom_call.1} parent=1 // loop_footer
      %s20 = sadd.s32 1, %s16
    $region7: #{tpu_custom_call.1} parent=1 // loop_footer_branch
      %15 = sbr.rel target = $region3
    $region8: #{tpu_custom_call.1} parent=1 // loop_exit
      _
    %918 = vsyncpa [#allocation3], 1
    %s919 = scalar_lea.sflag [#allocation3], 1
    %920 = vsyncpa %s919, 1
    %921 = vsyncpa [#allocation6], 1
    %922 = vsyncpa [#allocation4], 1
    %s923 = scalar_lea.sflag [#allocation4], 1
    %924 = vsyncpa %s923, 1

// kernel: tpu_custom_call.1
$region0: #{tpu_custom_call.1}
  #allocation0 [shape = 'u32[]', space=smem, size = 0x4, offset = 0x4, fixed_abs, tag = 'smem constant byte address 0x4 - core index']
  #allocation1 [shape = 'u32[144,128]{1,0:T(1,128)}', space=vmem, size = 0x12000, scoped, tag = 'internal scratch']
  %s0 = inlined_call_operand.hbm [shape: f32[128,128], index: 0, kind: input, shape index: {}]
  %s1 = inlined_call_operand.hbm [shape: bf16[3,128,128], index: 1, kind: input, shape index: {}]
  %s2 = inlined_call_operand.hbm [shape: f32[3,4,128], index: 2, kind: input, shape index: {}]
  %s3 = inlined_call_operand.hbm [shape: f32[128,128], index: 3, kind: output, shape index: {}]
  %s4 = sld [smem:[#allocation0]]
  $region57: #{tpu_custom_call.1} parent=0
    _
  %s6 = ssub.s32 1, %s4
  %s7 = scalar_select 0, %s6, %s4
  $region1: #{tpu_custom_call.1} parent=0
    #allocation2 [shape = 'u8[65536]{0}', space=vmem, size = 0x10000, scoped, tag = 'input window, operand 0']
    #allocation3 [shape = 's32[2]{0}', space=sflag, size = 0x8, scoped, tag = 'scoped memory for tpu_custom_call.1']
    #allocation4 [shape = 's32[2]{0}', space=sflag, size = 0x8, scoped, tag = 'scoped memory for tpu_custom_call.1']
    #allocation5 [shape = 'u8[98304]{0}', space=vmem, size = 0x18000, scoped, tag = 'input window, operand 1, single buffered']
    #allocation6 [shape = 's32[1]{0}', space=sflag, size = 0x4, scoped, tag = 'scoped memory for tpu_custom_call.1']
    #allocation7 [shape = 'u8[6144]{0}', space=vmem, size = 0x1800, scoped, tag = 'input window, operand 2, single buffered']
    #allocation8 [shape = 'u8[65536]{0}', space=vmem, size = 0x10000, scoped, tag = 'output window, operand 0']
    %8 = vsyncpa [#allocation3], 0
    %s9 = scalar_lea.sflag [#allocation3], 1
    %10 = vsyncpa %s9, 0
    %11 = vsyncpa [#allocation6], 0
    %12 = vsyncpa [#allocation4], 0
    %s13 = scalar_lea.sflag [#allocation4], 1
    %14 = vsyncpa %s13, 0
    loop: start=0, step=1, limit=4
    $region2: #{tpu_custom_call.1} parent=1 // loop_pre_header
      _
    $region3: #{tpu_custom_call.1} parent=1 // loop_header
      %s16 = sphi 0, %s20
      %p17 = scmp.ge.s32.totalorder %s16, 4
      %s26 = sphi 0, %s28
      %s29 = sphi 0, %s26
      %s30 = sphi 0, %s29
      %s46 = sphi 0, %s30
      %s50 = sphi 0, %s50
      %s52 = sphi 0, %s50
      %s53 = sphi 0, %s52
      %s67 = sphi 0, %s53
      %s71 = sphi 0, %s71
      %s73 = sphi 0, %s71
      %s74 = sphi 0, %s73
      %s88 = sphi 0, %s74
      %s94 = sphi 0, %s96
      %s97 = sphi 0, %s94
      %s98 = sphi 0, %s97
      %s114 = sphi 0, %s98
    $region4: #{tpu_custom_call.1} parent=1 // loop_header_branch
      %19 = sbr.rel (%p17) target = $region8
    $region5: #{tpu_custom_call.1} parent=1 // loop_body
      %s21 = ssub.s32 %s16, 1
      %s22 = ssub.s32 %s16, 2
      %s23 = sadd.s32 %s16, 1
      %s24 = ssub.s32 %s16, %s23
      %p25 = scmp.eq.s32.totalorder %s24, 0
      %s27 = sadd.s32 %s26, 1
      %s28 = scalar_select %p25, %s26, %s27
      %p31 = pneg %p25
      %p32 = scmp.eq.s32.totalorder %s16, 1
      %p33 = por %p31, %p32
      %p34 = scmp.ne.s32.totalorder %s26, %s29
      %p35 = scmp.eq.s32.totalorder %s16, 0
      %p36 = por %p34, %p35
      %p37 = scmp.ne.s32.totalorder %s26, %s29
      %p38 = scmp.eq.s32.totalorder %s21, 1
      %p39 = por %p37, %p38
      %p40 = scmp.ne.s32.totalorder %s29, %s30
      %p41 = scmp.eq.s32.totalorder %s21, 0
      %p42 = por %p40, %p41
      %p43 = scmp.ne.s32.totalorder %s29, %s30
      %p44 = scmp.eq.s32.totalorder %s22, 1
      %p45 = por %p43, %p44
      %p47 = scmp.ne.s32.totalorder %s30, %s46
      %p48 = scmp.eq.s32.totalorder %s22, 0
      %p49 = por %p47, %p48
      %s51 = sadd.s32 %s50, 1
      %p54 = scmp.eq.s32.totalorder %s16, 1
      %p55 = scmp.ne.s32.totalorder %s50, %s52
      %p56 = scmp.eq.s32.totalorder %s16, 0
      %p57 = por %p55, %p56
      %p58 = scmp.ne.s32.totalorder %s50, %s52
      %p59 = scmp.eq.s32.totalorder %s21, 1
      %p60 = por %p58, %p59
      %p61 = scmp.ne.s32.totalorder %s52, %s53
      %p62 = scmp.eq.s32.totalorder %s21, 0
      %p63 = por %p61, %p62
      %p64 = scmp.ne.s32.totalorder %s52, %s53
      %p65 = scmp.eq.s32.totalorder %s22, 1
      %p66 = por %p64, %p65
      %p68 = scmp.ne.s32.totalorder %s53, %s67
      %p69 = scmp.eq.s32.totalorder %s22, 0
      %p70 = por %p68, %p69
      %s72 = sadd.s32 %s71, 1
      %p75 = scmp.eq.s32.totalorder %s16, 1
      %p76 = scmp.ne.s32.totalorder %s71, %s73
      %p77 = scmp.eq.s32.totalorder %s16, 0
      %p78 = por %p76, %p77
      %p79 = scmp.ne.s32.totalorder %s71, %s73
      %p80 = scmp.eq.s32.totalorder %s21, 1
      %p81 = por %p79, %p80
      %p82 = scmp.ne.s32.totalorder %s73, %s74
      %p83 = scmp.eq.s32.totalorder %s21, 0
      %p84 = por %p82, %p83
      %p85 = scmp.ne.s32.totalorder %s73, %s74
      %p86 = scmp.eq.s32.totalorder %s22, 1
      %p87 = por %p85, %p86
      %p89 = scmp.ne.s32.totalorder %s74, %s88
      %p90 = scmp.eq.s32.totalorder %s22, 0
      %p91 = por %p89, %p90
      %s92 = ssub.s32 %s16, %s23
      %p93 = scmp.eq.s32.totalorder %s92, 0
      %s95 = sadd.s32 %s94, 1
      %s96 = scalar_select %p93, %s94, %s95
      %p99 = pneg %p93
      %p100 = scmp.eq.s32.totalorder %s16, 1
      %p101 = por %p99, %p100
      %p102 = scmp.ne.s32.totalorder %s94, %s97
      %p103 = scmp.eq.s32.totalorder %s16, 0
      %p104 = por %p102, %p103
      %p105 = scmp.ne.s32.totalorder %s94, %s97
      %p106 = scmp.eq.s32.totalorder %s21, 1
      %p107 = por %p105, %p106
      %p108 = scmp.ne.s32.totalorder %s97, %s98
      %p109 = scmp.eq.s32.totalorder %s21, 0
      %p110 = por %p108, %p109
      %p111 = scmp.ne.s32.totalorder %s97, %s98
      %p112 = scmp.eq.s32.totalorder %s22, 1
      %p113 = por %p111, %p112
      %p115 = scmp.ne.s32.totalorder %s98, %s114
      %p116 = scmp.eq.s32.totalorder %s22, 0
      %p117 = por %p115, %p116
      %p118 = scmp.le.s32.totalorder 1, %s16
      %p119 = scmp.lt.s32.totalorder %s16, 3
      %p120 = pnand %p118, %p119
      %p121 = pneg %p120
      // Predicated region
      $region9: #{tpu_custom_call.1} parent=5 // pred_check
        _
      $region10: #{tpu_custom_call.1} parent=5 // pred_check_branch
        %123 = sbr.rel (%p120) target = $region12
      $region11: #{tpu_custom_call.1} parent=5 // pred_region
        %s124 = ssub.s32 %s16, 1
        // Predicated region
        $region13: #{tpu_custom_call.1} parent=11 // pred_check
          %p125 = pneg %p63
        $region14: #{tpu_custom_call.1} parent=11 // pred_check_branch
          %127 = sbr.rel (%p125) target = $region16
        $region15: #{tpu_custom_call.1} parent=11 // pred_region
          %s129 = ssub.s32 3072, 3072
          %130 = vsyncadd [#allocation6], %s129
          %s131 = sshll.u32 [#allocation5], 4
          %s132 = int_to_ptr.vmem [resolvable:$true] %s131
          %137 = dma.hbm_to_vmem [thread:$0]  %s1, 3072, %s132, [#allocation6], 64, 64, 4
        $region16: #{tpu_custom_call.1} parent=11 // pred_fallthru
          _
        // Predicated region
        $region17: #{tpu_custom_call.1} parent=11 // pred_check
          %p138 = pneg %p84
        $region18: #{tpu_custom_call.1} parent=11 // pred_check_branch
          %140 = sbr.rel (%p138) target = $region20
        $region19: #{tpu_custom_call.1} parent=11 // pred_region
          %s142 = ssub.s32 192, 192
          %143 = vsyncadd [#allocation6], %s142
          %s144 = sshll.u32 [#allocation7], 4
          %s145 = int_to_ptr.vmem [resolvable:$true] %s144
          %150 = dma.hbm_to_vmem [thread:$0]  %s2, 192, %s145, [#allocation6], 64, 64, 4
        $region20: #{tpu_custom_call.1} parent=11 // pred_fallthru
          _
      $region12: #{tpu_custom_call.1} parent=5 // pred_fallthru
        _
      %p151 = scmp.lt.s32.totalorder %s16, 2
      // Predicated region
      $region21: #{tpu_custom_call.1} parent=5 // pred_check
        %p152 = pneg %p151
      $region22: #{tpu_custom_call.1} parent=5 // pred_check_branch
        %154 = sbr.rel (%p152) target = $region24
      $region23: #{tpu_custom_call.1} parent=5 // pred_region
        // Predicated region
        $region25: #{tpu_custom_call.1} parent=23 // pred_check
          %p155 = pneg %p36
        $region26: #{tpu_custom_call.1} parent=23 // pred_check_branch
          %157 = sbr.rel (%p155) target = $region28
        $region27: #{tpu_custom_call.1} parent=23 // pred_region
          %s158 = sand.u32 %s26, 1
          %s159 = scalar_lea.sflag [#allocation3], %s158
          %s160 = sand.u32 %s26, 1
          %s161 = smul.addr %s160, 64
          %s162 = scalar_lea.vmem [#allocation2], %s161
          %s163 = smul.u32 8, %s16
          %s165 = ssub.s32 1024, 1024
          %166 = vsyncadd %s159, %s165
          %s167 = smul.addr %s163, 128
          %s168 = scalar_lea.hbm %s0, %s167
          %s169 = sshll.u32 %s162, 4
          %s170 = int_to_ptr.vmem [resolvable:$true] %s169
          %175 = dma.hbm_to_vmem [thread:$0]  %s168, 1024, %s170, %s159, 128, 128, 8
        $region28: #{tpu_custom_call.1} parent=23 // pred_fallthru
          _
      $region24: #{tpu_custom_call.1} parent=5 // pred_fallthru
        _
      %p176 = scmp.le.s32.totalorder 1, %s16
      %p177 = scmp.lt.s32.totalorder %s16, 3
      %p178 = pnand %p176, %p177
      %p179 = pneg %p178
      // Predicated region
      $region29: #{tpu_custom_call.1} parent=5 // pred_check
        _
      $region30: #{tpu_custom_call.1} parent=5 // pred_check_branch
        %181 = sbr.rel (%p178) target = $region32
      $region31: #{tpu_custom_call.1} parent=5 // pred_region
        %s182 = ssub.s32 %s16, 1
        %s183 = sand.u32 %s29, 1
        %s184 = scalar_lea.sflag [#allocation3], %s183
        %s185 = sand.u32 %s29, 1
        %s186 = smul.addr %s185, 64
        %s187 = scalar_lea.vmem [#allocation2], %s186
        // Predicated region
        $region33: #{tpu_custom_call.1} parent=31 // pred_check
          %p188 = pneg %p42
        $region34: #{tpu_custom_call.1} parent=31 // pred_check_branch
          %190 = sbr.rel (%p188) target = $region36
        $region35: #{tpu_custom_call.1} parent=31 // pred_region
          %191 = dma.done %s184, 1024
        $region36: #{tpu_custom_call.1} parent=31 // pred_fallthru
          _
        // Predicated region
        $region37: #{tpu_custom_call.1} parent=31 // pred_check
          %p192 = pneg %p63
        $region38: #{tpu_custom_call.1} parent=31 // pred_check_branch
          %194 = sbr.rel (%p192) target = $region40
        $region39: #{tpu_custom_call.1} parent=31 // pred_region
          %195 = dma.done [#allocation6], 3072
        $region40: #{tpu_custom_call.1} parent=31 // pred_fallthru
          _
        // Predicated region
        $region41: #{tpu_custom_call.1} parent=31 // pred_check
          %p196 = pneg %p84
        $region42: #{tpu_custom_call.1} parent=31 // pred_check_branch
          %198 = sbr.rel (%p196) target = $region44
        $region43: #{tpu_custom_call.1} parent=31 // pred_region
          %199 = dma.done [#allocation6], 192
        $region44: #{tpu_custom_call.1} parent=31 // pred_fallthru
          _
        %s200 = sand.u32 %s29, 1
        %s201 = scalar_lea.sflag [#allocation3], %s200
        %s202 = sand.u32 %s29, 1
        %s203 = smul.addr %s202, 64
        %s204 = scalar_lea.vmem [#allocation2], %s203
        %p205 = pneg %p42
        %p206 = pneg %p39
        %p207 = pneg %p63
        %p208 = pneg %p60
        %p209 = pneg %p84
        %p210 = pneg %p81
        %p211 = pneg %p110
        %p212 = pneg %p107
        %s213 = sand.u32 %s97, 1
        %s214 = scalar_lea.sflag [#allocation4], %s213
        %s215 = sand.u32 %s97, 1
        %s216 = smul.addr %s215, 64
        %s217 = scalar_lea.vmem [#allocation8], %s216
        %s218 = smul.u32 8, %s21
        %s219 = smul.u32 8, %s21
        %v221 = vld [vmem:[%s187] sm:$0xff]
        %v222 = vld [vmem:[%s187 + $0x8] sm:$0xff]
        %v223 = vld [vmem:[%s187 + $0x10] sm:$0xff]
        %v224 = vld [vmem:[%s187 + $0x18] sm:$0xff]
        %v225 = vld [vmem:[%s187 + $0x20] sm:$0xff]
        %v226 = vld [vmem:[%s187 + $0x28] sm:$0xff]
        %v227 = vld [vmem:[%s187 + $0x30] sm:$0xff]
        %v228 = vld [vmem:[%s187 + $0x38] sm:$0xff]
        %v229 = vld [vmem:[#allocation7] sm:$0xf]
        %v230 = vpack.c.bf16 %v222, %v221
        %v231 = vpack.c.bf16 %v224, %v223
        %v232 = vpack.c.bf16 %v226, %v225
        %v233 = vpack.c.bf16 %v228, %v227
        %v234 = vld [vmem:[#allocation5] sm:$0xf]
        %v235 = vld [vmem:[#allocation5 + $0x4] sm:$0xf]
        %v236 = vld [vmem:[#allocation5 + $0x8] sm:$0xf]
        %v237 = vld [vmem:[#allocation5 + $0xc] sm:$0xf]
        %v238 = vld [vmem:[#allocation5 + $0x10] sm:$0xf]
        %v239 = vld [vmem:[#allocation5 + $0x14] sm:$0xf]
        %v240 = vld [vmem:[#allocation5 + $0x18] sm:$0xf]
        %v241 = vld [vmem:[#allocation5 + $0x1c] sm:$0xf]
        %v242 = vld [vmem:[#allocation5 + $0x20] sm:$0xf]
        %v243 = vld [vmem:[#allocation5 + $0x24] sm:$0xf]
        %v244 = vld [vmem:[#allocation5 + $0x28] sm:$0xf]
        %v245 = vld [vmem:[#allocation5 + $0x2c] sm:$0xf]
        %v246 = vld [vmem:[#allocation5 + $0x30] sm:$0xf]
        %v247 = vld [vmem:[#allocation5 + $0x34] sm:$0xf]
        %v248 = vld [vmem:[#allocation5 + $0x38] sm:$0xf]
        %v249 = vld [vmem:[#allocation5 + $0x3c] sm:$0xf]
        %v250 = vlaneseq
        %v251 = vshrl.u32 %v250, 7
        %v252 = vsub.s32 0, %v251
        %v253 = vrot.slane %v229, %v252
        %v270 = vunpack.c.l.b16 %v234
        %v271 = vunpack.c.l.b16 %v235
        %v272 = vunpack.c.l.b16 %v236
        %v273 = vunpack.c.l.b16 %v237
        %v274 = vunpack.c.l.b16 %v238
        %v275 = vunpack.c.l.b16 %v239
        %v276 = vunpack.c.l.b16 %v240
        %v277 = vunpack.c.l.b16 %v241
        %v278 = vunpack.c.l.b16 %v242
        %v279 = vunpack.c.l.b16 %v243
        %v280 = vunpack.c.l.b16 %v244
        %v281 = vunpack.c.l.b16 %v245
        %v282 = vunpack.c.l.b16 %v246
        %v283 = vunpack.c.l.b16 %v247
        %v284 = vunpack.c.l.b16 %v248
        %v285 = vunpack.c.l.b16 %v249
        %v286 = vpack.c.b16 %v271, %v270
        %v287 = vpack.c.b16 %v273, %v272
        %v288 = vpack.c.b16 %v275, %v274
        %v289 = vpack.c.b16 %v277, %v276
        %v290 = vpack.c.b16 %v279, %v278
        %v291 = vpack.c.b16 %v281, %v280
        %v292 = vpack.c.b16 %v283, %v282
        %v293 = vpack.c.b16 %v285, %v284
        %302 = vmatprep.subr.bf16.mxu0 0
        %303 = vmatpush1.bf16.msra.mxu0 %v286
        %304 = vmatprep.subr.bf16.mxu0 0
        %305 = vmatpush1.bf16.msra.mxu0 %v287
        %306 = vmatprep.subr.bf16.mxu0 0
        %307 = vmatpush1.bf16.msra.mxu0 %v288
        %308 = vmatprep.subr.bf16.mxu0 0
        %309 = vmatpush1.bf16.msra.mxu0 %v289
        %310 = vmatprep.subr.bf16.mxu0 0
        %311 = vmatpush1.bf16.msra.mxu0 %v290
        %312 = vmatprep.subr.bf16.mxu0 0
        %313 = vmatpush1.bf16.msra.mxu0 %v291
        %314 = vmatprep.subr.bf16.mxu0 0
        %315 = vmatpush1.bf16.msra.mxu0 %v292
        %316 = vmatprep.subr.bf16.mxu0 0
        %317 = vmatpush1.bf16.msra.mxu0 %v293
        %318 = vmatprep.subr.bf16.mxu0 0
        %319 = vmatpush1.bf16.msra.mxu0 0
        %320 = vmatprep.subr.bf16.mxu0 0
        %321 = vmatpush1.bf16.msra.mxu0 0
        %322 = vmatprep.subr.bf16.mxu0 0
        %323 = vmatpush1.bf16.msra.mxu0 0
        %324 = vmatprep.subr.bf16.mxu0 0
        %325 = vmatpush1.bf16.msra.mxu0 0
        %326 = vmatprep.subr.bf16.mxu0 0
        %327 = vmatpush1.bf16.msra.mxu0 0
        %328 = vmatprep.subr.bf16.mxu0 0
        %329 = vmatpush1.bf16.msra.mxu0 0
        %330 = vmatprep.subr.bf16.mxu0 0
        %331 = vmatpush1.bf16.msra.mxu0 0
        %332 = vmatprep.subr.bf16.mxu0 0
        %333 = vmatpush1.bf16.msra.mxu0 0
        %334 = vmatprep.mubr.bf16.mxu0 0
        %335 = vmatmul.mubr.bf16.gmra.mrb[0].mxu0 %v230
        %v336 = vpop.f32.mrb[0].mxu0
        %v337 = vadd.f32 %v253, %v336
        %v338 = vpop.f32.mrb[0].mxu0
        %v339 = vpop.f32.mrb[0].mxu0
        %v340 = vadd.f32 %v253, %v339
        %v341 = vpop.f32.mrb[0].mxu0
        %342 = vmatprep.mubr.bf16.mxu0 0
        %343 = vmatmul.mubr.bf16.gmra.mrb[0].mxu0 %v231
        %v344 = vpop.f32.mrb[0].mxu0
        %v345 = vadd.f32 %v253, %v344
        %v346 = vpop.f32.mrb[0].mxu0
        %v347 = vpop.f32.mrb[0].mxu0
        %v348 = vadd.f32 %v253, %v347
        %v349 = vpop.f32.mrb[0].mxu0
        %350 = vmatprep.mubr.bf16.mxu0 0
        %351 = vmatmul.mubr.bf16.gmra.mrb[0].mxu0 %v232
        %v352 = vpop.f32.mrb[0].mxu0
        %v353 = vadd.f32 %v253, %v352
        %v354 = vpop.f32.mrb[0].mxu0
        %v355 = vpop.f32.mrb[0].mxu0
        %v356 = vadd.f32 %v253, %v355
        %v357 = vpop.f32.mrb[0].mxu0
        %358 = vmatprep.mubr.bf16.mxu0 0
        %359 = vmatmul.mubr.bf16.gmra.mrb[0].mxu0 %v233
        %v360 = vpop.f32.mrb[0].mxu0
        %v361 = vadd.f32 %v253, %v360
        %v362 = vpop.f32.mrb[0].mxu0
        %v363 = vpop.f32.mrb[0].mxu0
        %v364 = vadd.f32 %v253, %v363
        %v365 = vpop.f32.mrb[0].mxu0
        %366 = vdwg.mxu0
        %v367 = vlaneseq
        %v368 = vshrl.u32 %v367, 7
        %v369 = vsub.s32 2, %v368
        %v370 = vrot.slane %v229, %v369
        %v371 = vmul.f32 %v221, %v370
        %v372 = vmul.f32 %v222, %v370
        %v373 = vmul.f32 %v223, %v370
        %v374 = vmul.f32 %v224, %v370
        %v375 = vmul.f32 %v225, %v370
        %v376 = vmul.f32 %v226, %v370
        %v377 = vmul.f32 %v227, %v370
        %v378 = vmul.f32 %v228, %v370
        %379 = vadd.xlane.f32.xlu0 %v371
        %v380 = vpop.xlane.xlu0 %379
        %381 = vadd.xlane.f32.xlu0 %v372
        %v382 = vpop.xlane.xlu0 %381
        %383 = vadd.xlane.f32.xlu0 %v373
        %v384 = vpop.xlane.xlu0 %383
        %385 = vadd.xlane.f32.xlu0 %v374
        %v386 = vpop.xlane.xlu0 %385
        %387 = vadd.xlane.f32.xlu0 %v375
        %v388 = vpop.xlane.xlu0 %387
        %389 = vadd.xlane.f32.xlu0 %v376
        %v390 = vpop.xlane.xlu0 %389
        %391 = vadd.xlane.f32.xlu0 %v377
        %v392 = vpop.xlane.xlu0 %391
        %393 = vadd.xlane.f32.xlu0 %v378
        %v394 = vpop.xlane.xlu0 %393
        %v395 = vlaneseq
        %v396 = vshrl.u32 %v395, 7
        %v397 = vsub.s32 3, %v396
        %v398 = vrot.slane %v229, %v397
        %v399 = vadd.f32 %v380, %v398
        %v400 = vadd.f32 %v382, %v398
        %v401 = vadd.f32 %v384, %v398
        %v402 = vadd.f32 %v386, %v398
        %v403 = vadd.f32 %v388, %v398
        %v404 = vadd.f32 %v390, %v398
        %v405 = vadd.f32 %v392, %v398
        %v406 = vadd.f32 %v394, %v398
        %v407 = vmul.f32 %v399, %v221
        %v408 = vmul.f32 %v400, %v222
        %v409 = vmul.f32 %v401, %v223
        %v410 = vmul.f32 %v402, %v224
        %v411 = vmul.f32 %v403, %v225
        %v412 = vmul.f32 %v404, %v226
        %v413 = vmul.f32 %v405, %v227
        %v414 = vmul.f32 %v406, %v228
        %v415 = vlaneseq
        %v416 = vshrl.u32 %v415, 7
        %v417 = vsub.s32 1, %v416
        %v418 = vrot.slane %v229, %v417
        %v419 = vadd.f32 %v407, %v418
        %v420 = vadd.f32 %v408, %v418
        %v421 = vadd.f32 %v409, %v418
        %v422 = vadd.f32 %v410, %v418
        %v423 = vadd.f32 %v411, %v418
        %v424 = vadd.f32 %v412, %v418
        %v425 = vadd.f32 %v413, %v418
        %v426 = vadd.f32 %v414, %v418
        %v427 = vadd.f32 %v419, %v337
        %v428 = vadd.f32 %v420, %v340
        %v429 = vadd.f32 %v421, %v345
        %v430 = vadd.f32 %v422, %v348
        %v431 = vadd.f32 %v423, %v353
        %v432 = vadd.f32 %v424, %v356
        %v433 = vadd.f32 %v425, %v361
        %v434 = vadd.f32 %v426, %v364
        %v435 = vmax.f32 %v427, 0.0
        %v436 = vmax.f32 %v428, 0.0
        %v437 = vmax.f32 %v429, 0.0
        %v438 = vmax.f32 %v430, 0.0
        %v439 = vmax.f32 %v431, 0.0
        %v440 = vmax.f32 %v432, 0.0
        %v441 = vmax.f32 %v433, 0.0
        %v442 = vmax.f32 %v434, 0.0
        %s443 = scalar_lea.vmem [#allocation7], 4
        %v444 = vld [vmem:[%s443] sm:$0xf]
        %v445 = vpack.c.bf16 %v436, %v435
        %v446 = vpack.c.bf16 %v438, %v437
        %v447 = vpack.c.bf16 %v440, %v439
        %v448 = vpack.c.bf16 %v442, %v441
        %s449 = scalar_lea.vmem [#allocation5], 64
        %v450 = vld [vmem:[%s449] sm:$0xf]
        %v451 = vld [vmem:[%s449 + $0x4] sm:$0xf]
        %v452 = vld [vmem:[%s449 + $0x8] sm:$0xf]
        %v453 = vld [vmem:[%s449 + $0xc] sm:$0xf]
        %v454 = vld [vmem:[%s449 + $0x10] sm:$0xf]
        %v455 = vld [vmem:[%s449 + $0x14] sm:$0xf]
        %v456 = vld [vmem:[%s449 + $0x18] sm:$0xf]
        %v457 = vld [vmem:[%s449 + $0x1c] sm:$0xf]
        %v458 = vld [vmem:[%s449 + $0x20] sm:$0xf]
        %v459 = vld [vmem:[%s449 + $0x24] sm:$0xf]
        %v460 = vld [vmem:[%s449 + $0x28] sm:$0xf]
        %v461 = vld [vmem:[%s449 + $0x2c] sm:$0xf]
        %v462 = vld [vmem:[%s449 + $0x30] sm:$0xf]
        %v463 = vld [vmem:[%s449 + $0x34] sm:$0xf]
        %v464 = vld [vmem:[%s449 + $0x38] sm:$0xf]
        %v465 = vld [vmem:[%s449 + $0x3c] sm:$0xf]
        %v466 = vlaneseq
        %v467 = vshrl.u32 %v466, 7
        %v468 = vsub.s32 0, %v467
        %v469 = vrot.slane %v444, %v468
        %v486 = vunpack.c.l.b16 %v450
        %v487 = vunpack.c.l.b16 %v451
        %v488 = vunpack.c.l.b16 %v452
        %v489 = vunpack.c.l.b16 %v453
        %v490 = vunpack.c.l.b16 %v454
        %v491 = vunpack.c.l.b16 %v455
        %v492 = vunpack.c.l.b16 %v456
        %v493 = vunpack.c.l.b16 %v457
        %v494 = vunpack.c.l.b16 %v458
        %v495 = vunpack.c.l.b16 %v459
        %v496 = vunpack.c.l.b16 %v460
        %v497 = vunpack.c.l.b16 %v461
        %v498 = vunpack.c.l.b16 %v462
        %v499 = vunpack.c.l.b16 %v463
        %v500 = vunpack.c.l.b16 %v464
        %v501 = vunpack.c.l.b16 %v465
        %v502 = vpack.c.b16 %v487, %v486
        %v503 = vpack.c.b16 %v489, %v488
        %v504 = vpack.c.b16 %v491, %v490
        %v505 = vpack.c.b16 %v493, %v492
        %v506 = vpack.c.b16 %v495, %v494
        %v507 = vpack.c.b16 %v497, %v496
        %v508 = vpack.c.b16 %v499, %v498
        %v509 = vpack.c.b16 %v501, %v500
        %518 = vmatprep.subr.bf16.mxu0 0
        %519 = vmatpush1.bf16.msra.mxu0 %v502
        %520 = vmatprep.subr.bf16.mxu0 0
        %521 = vmatpush1.bf16.msra.mxu0 %v503
        %522 = vmatprep.subr.bf16.mxu0 0
        %523 = vmatpush1.bf16.msra.mxu0 %v504
        %524 = vmatprep.subr.bf16.mxu0 0
        %525 = vmatpush1.bf16.msra.mxu0 %v505
        %526 = vmatprep.subr.bf16.mxu0 0
        %527 = vmatpush1.bf16.msra.mxu0 %v506
        %528 = vmatprep.subr.bf16.mxu0 0
        %529 = vmatpush1.bf16.msra.mxu0 %v507
        %530 = vmatprep.subr.bf16.mxu0 0
        %531 = vmatpush1.bf16.msra.mxu0 %v508
        %532 = vmatprep.subr.bf16.mxu0 0
        %533 = vmatpush1.bf16.msra.mxu0 %v509
        %534 = vmatprep.subr.bf16.mxu0 0
        %535 = vmatpush1.bf16.msra.mxu0 0
        %536 = vmatprep.subr.bf16.mxu0 0
        %537 = vmatpush1.bf16.msra.mxu0 0
        %538 = vmatprep.subr.bf16.mxu0 0
        %539 = vmatpush1.bf16.msra.mxu0 0
        %540 = vmatprep.subr.bf16.mxu0 0
        %541 = vmatpush1.bf16.msra.mxu0 0
        %542 = vmatprep.subr.bf16.mxu0 0
        %543 = vmatpush1.bf16.msra.mxu0 0
        %544 = vmatprep.subr.bf16.mxu0 0
        %545 = vmatpush1.bf16.msra.mxu0 0
        %546 = vmatprep.subr.bf16.mxu0 0
        %547 = vmatpush1.bf16.msra.mxu0 0
        %548 = vmatprep.subr.bf16.mxu0 0
        %549 = vmatpush1.bf16.msra.mxu0 0
        %550 = vmatprep.mubr.bf16.mxu0 0
        %551 = vmatmul.mubr.bf16.gmra.mrb[0].mxu0 %v445
        %v552 = vpop.f32.mrb[0].mxu0
        %v553 = vadd.f32 %v469, %v552
        %v554 = vpop.f32.mrb[0].mxu0
        %v555 = vpop.f32.mrb[0].mxu0
        %v556 = vadd.f32 %v469, %v555
        %v557 = vpop.f32.mrb[0].mxu0
        %558 = vmatprep.mubr.bf16.mxu0 0
        %559 = vmatmul.mubr.bf16.gmra.mrb[0].mxu0 %v446
        %v560 = vpop.f32.mrb[0].mxu0
        %v561 = vadd.f32 %v469, %v560
        %v562 = vpop.f32.mrb[0].mxu0
        %v563 = vpop.f32.mrb[0].mxu0
        %v564 = vadd.f32 %v469, %v563
        %v565 = vpop.f32.mrb[0].mxu0
        %566 = vmatprep.mubr.bf16.mxu0 0
        %567 = vmatmul.mubr.bf16.gmra.mrb[0].mxu0 %v447
        %v568 = vpop.f32.mrb[0].mxu0
        %v569 = vadd.f32 %v469, %v568
        %v570 = vpop.f32.mrb[0].mxu0
        %v571 = vpop.f32.mrb[0].mxu0
        %v572 = vadd.f32 %v469, %v571
        %v573 = vpop.f32.mrb[0].mxu0
        %574 = vmatprep.mubr.bf16.mxu0 0
        %575 = vmatmul.mubr.bf16.gmra.mrb[0].mxu0 %v448
        %v576 = vpop.f32.mrb[0].mxu0
        %v577 = vadd.f32 %v469, %v576
        %v578 = vpop.f32.mrb[0].mxu0
        %v579 = vpop.f32.mrb[0].mxu0
        %v580 = vadd.f32 %v469, %v579
        %v581 = vpop.f32.mrb[0].mxu0
        %582 = vdwg.mxu0
        %v583 = vlaneseq
        %v584 = vshrl.u32 %v583, 7
        %v585 = vsub.s32 2, %v584
        %v586 = vrot.slane %v444, %v585
        %v587 = vmul.f32 %v435, %v586
        %v588 = vmul.f32 %v436, %v586
        %v589 = vmul.f32 %v437, %v586
        %v590 = vmul.f32 %v438, %v586
        %v591 = vmul.f32 %v439, %v586
        %v592 = vmul.f32 %v440, %v586
        %v593 = vmul.f32 %v441, %v586
        %v594 = vmul.f32 %v442, %v586
        %595 = vadd.xlane.f32.xlu0 %v587
        %v596 = vpop.xlane.xlu0 %595
        %597 = vadd.xlane.f32.xlu0 %v588
        %v598 = vpop.xlane.xlu0 %597
        %599 = vadd.xlane.f32.xlu0 %v589
        %v600 = vpop.xlane.xlu0 %599
        %601 = vadd.xlane.f32.xlu0 %v590
        %v602 = vpop.xlane.xlu0 %601
        %603 = vadd.xlane.f32.xlu0 %v591
        %v604 = vpop.xlane.xlu0 %603
        %605 = vadd.xlane.f32.xlu0 %v592
        %v606 = vpop.xlane.xlu0 %605
        %607 = vadd.xlane.f32.xlu0 %v593
        %v608 = vpop.xlane.xlu0 %607
        %609 = vadd.xlane.f32.xlu0 %v594
        %v610 = vpop.xlane.xlu0 %609
        %v611 = vlaneseq
        %v612 = vshrl.u32 %v611, 7
        %v613 = vsub.s32 3, %v612
        %v614 = vrot.slane %v444, %v613
        %v615 = vadd.f32 %v596, %v614
        %v616 = vadd.f32 %v598, %v614
        %v617 = vadd.f32 %v600, %v614
        %v618 = vadd.f32 %v602, %v614
        %v619 = vadd.f32 %v604, %v614
        %v620 = vadd.f32 %v606, %v614
        %v621 = vadd.f32 %v608, %v614
        %v622 = vadd.f32 %v610, %v614
        %v623 = vmul.f32 %v615, %v221
        %v624 = vmul.f32 %v616, %v222
        %v625 = vmul.f32 %v617, %v223
        %v626 = vmul.f32 %v618, %v224
        %v627 = vmul.f32 %v619, %v225
        %v628 = vmul.f32 %v620, %v226
        %v629 = vmul.f32 %v621, %v227
        %v630 = vmul.f32 %v622, %v228
        %v631 = vlaneseq
        %v632 = vshrl.u32 %v631, 7
        %v633 = vsub.s32 1, %v632
        %v634 = vrot.slane %v444, %v633
        %v635 = vadd.f32 %v623, %v634
        %v636 = vadd.f32 %v624, %v634
        %v637 = vadd.f32 %v625, %v634
        %v638 = vadd.f32 %v626, %v634
        %v639 = vadd.f32 %v627, %v634
        %v640 = vadd.f32 %v628, %v634
        %v641 = vadd.f32 %v629, %v634
        %v642 = vadd.f32 %v630, %v634
        %v643 = vadd.f32 %v635, %v553
        %v644 = vadd.f32 %v636, %v556
        %v645 = vadd.f32 %v637, %v561
        %v646 = vadd.f32 %v638, %v564
        %v647 = vadd.f32 %v639, %v569
        %v648 = vadd.f32 %v640, %v572
        %v649 = vadd.f32 %v641, %v577
        %v650 = vadd.f32 %v642, %v580
        %v651 = vmax.f32 %v643, 0.0
        %v652 = vmax.f32 %v644, 0.0
        %v653 = vmax.f32 %v645, 0.0
        %v654 = vmax.f32 %v646, 0.0
        %v655 = vmax.f32 %v647, 0.0
        %v656 = vmax.f32 %v648, 0.0
        %v657 = vmax.f32 %v649, 0.0
        %v658 = vmax.f32 %v650, 0.0
        %s659 = scalar_lea.vmem [#allocation7], 8
        %v660 = vld [vmem:[%s659] sm:$0xf]
        %v661 = vpack.c.bf16 %v652, %v651
        %v662 = vpack.c.bf16 %v654, %v653
        %v663 = vpack.c.bf16 %v656, %v655
        %v664 = vpack.c.bf16 %v658, %v657
        %s665 = scalar_lea.vmem [#allocation5], 128
        %v666 = vld [vmem:[%s665] sm:$0xf]
        %v667 = vld [vmem:[%s665 + $0x4] sm:$0xf]
        %v668 = vld [vmem:[%s665 + $0x8] sm:$0xf]
        %v669 = vld [vmem:[%s665 + $0xc] sm:$0xf]
        %v670 = vld [vmem:[%s665 + $0x10] sm:$0xf]
        %v671 = vld [vmem:[%s665 + $0x14] sm:$0xf]
        %v672 = vld [vmem:[%s665 + $0x18] sm:$0xf]
        %v673 = vld [vmem:[%s665 + $0x1c] sm:$0xf]
        %v674 = vld [vmem:[%s665 + $0x20] sm:$0xf]
        %v675 = vld [vmem:[%s665 + $0x24] sm:$0xf]
        %v676 = vld [vmem:[%s665 + $0x28] sm:$0xf]
        %v677 = vld [vmem:[%s665 + $0x2c] sm:$0xf]
        %v678 = vld [vmem:[%s665 + $0x30] sm:$0xf]
        %v679 = vld [vmem:[%s665 + $0x34] sm:$0xf]
        %v680 = vld [vmem:[%s665 + $0x38] sm:$0xf]
        %v681 = vld [vmem:[%s665 + $0x3c] sm:$0xf]
        %v682 = vlaneseq
        %v683 = vshrl.u32 %v682, 7
        %v684 = vsub.s32 0, %v683
        %v685 = vrot.slane %v660, %v684
        %v702 = vunpack.c.l.b16 %v666
        %v703 = vunpack.c.l.b16 %v667
        %v704 = vunpack.c.l.b16 %v668
        %v705 = vunpack.c.l.b16 %v669
        %v706 = vunpack.c.l.b16 %v670
        %v707 = vunpack.c.l.b16 %v671
        %v708 = vunpack.c.l.b16 %v672
        %v709 = vunpack.c.l.b16 %v673
        %v710 = vunpack.c.l.b16 %v674
        %v711 = vunpack.c.l.b16 %v675
        %v712 = vunpack.c.l.b16 %v676
        %v713 = vunpack.c.l.b16 %v677
        %v714 = vunpack.c.l.b16 %v678
        %v715 = vunpack.c.l.b16 %v679
        %v716 = vunpack.c.l.b16 %v680
        %v717 = vunpack.c.l.b16 %v681
        %v718 = vpack.c.b16 %v703, %v702
        %v719 = vpack.c.b16 %v705, %v704
        %v720 = vpack.c.b16 %v707, %v706
        %v721 = vpack.c.b16 %v709, %v708
        %v722 = vpack.c.b16 %v711, %v710
        %v723 = vpack.c.b16 %v713, %v712
        %v724 = vpack.c.b16 %v715, %v714
        %v725 = vpack.c.b16 %v717, %v716
        %734 = vmatprep.subr.bf16.mxu0 0
        %735 = vmatpush1.bf16.msra.mxu0 %v718
        %736 = vmatprep.subr.bf16.mxu0 0
        %737 = vmatpush1.bf16.msra.mxu0 %v719
        %738 = vmatprep.subr.bf16.mxu0 0
        %739 = vmatpush1.bf16.msra.mxu0 %v720
        %740 = vmatprep.subr.bf16.mxu0 0
        %741 = vmatpush1.bf16.msra.mxu0 %v721
        %742 = vmatprep.subr.bf16.mxu0 0
        %743 = vmatpush1.bf16.msra.mxu0 %v722
        %744 = vmatprep.subr.bf16.mxu0 0
        %745 = vmatpush1.bf16.msra.mxu0 %v723
        %746 = vmatprep.subr.bf16.mxu0 0
        %747 = vmatpush1.bf16.msra.mxu0 %v724
        %748 = vmatprep.subr.bf16.mxu0 0
        %749 = vmatpush1.bf16.msra.mxu0 %v725
        %750 = vmatprep.subr.bf16.mxu0 0
        %751 = vmatpush1.bf16.msra.mxu0 0
        %752 = vmatprep.subr.bf16.mxu0 0
        %753 = vmatpush1.bf16.msra.mxu0 0
        %754 = vmatprep.subr.bf16.mxu0 0
        %755 = vmatpush1.bf16.msra.mxu0 0
        %756 = vmatprep.subr.bf16.mxu0 0
        %757 = vmatpush1.bf16.msra.mxu0 0
        %758 = vmatprep.subr.bf16.mxu0 0
        %759 = vmatpush1.bf16.msra.mxu0 0
        %760 = vmatprep.subr.bf16.mxu0 0
        %761 = vmatpush1.bf16.msra.mxu0 0
        %762 = vmatprep.subr.bf16.mxu0 0
        %763 = vmatpush1.bf16.msra.mxu0 0
        %764 = vmatprep.subr.bf16.mxu0 0
        %765 = vmatpush1.bf16.msra.mxu0 0
        %766 = vmatprep.mubr.bf16.mxu0 0
        %767 = vmatmul.mubr.bf16.gmra.mrb[0].mxu0 %v661
        %v768 = vpop.f32.mrb[0].mxu0
        %v769 = vadd.f32 %v685, %v768
        %v770 = vpop.f32.mrb[0].mxu0
        %v771 = vpop.f32.mrb[0].mxu0
        %v772 = vadd.f32 %v685, %v771
        %v773 = vpop.f32.mrb[0].mxu0
        %774 = vmatprep.mubr.bf16.mxu0 0
        %775 = vmatmul.mubr.bf16.gmra.mrb[0].mxu0 %v662
        %v776 = vpop.f32.mrb[0].mxu0
        %v777 = vadd.f32 %v685, %v776
        %v778 = vpop.f32.mrb[0].mxu0
        %v779 = vpop.f32.mrb[0].mxu0
        %v780 = vadd.f32 %v685, %v779
        %v781 = vpop.f32.mrb[0].mxu0
        %782 = vmatprep.mubr.bf16.mxu0 0
        %783 = vmatmul.mubr.bf16.gmra.mrb[0].mxu0 %v663
        %v784 = vpop.f32.mrb[0].mxu0
        %v785 = vadd.f32 %v685, %v784
        %v786 = vpop.f32.mrb[0].mxu0
        %v787 = vpop.f32.mrb[0].mxu0
        %v788 = vadd.f32 %v685, %v787
        %v789 = vpop.f32.mrb[0].mxu0
        %790 = vmatprep.mubr.bf16.mxu0 0
        %791 = vmatmul.mubr.bf16.gmra.mrb[0].mxu0 %v664
        %v792 = vpop.f32.mrb[0].mxu0
        %v793 = vadd.f32 %v685, %v792
        %v794 = vpop.f32.mrb[0].mxu0
        %v795 = vpop.f32.mrb[0].mxu0
        %v796 = vadd.f32 %v685, %v795
        %v797 = vpop.f32.mrb[0].mxu0
        %798 = vdwg.mxu0
        %v799 = vlaneseq
        %v800 = vshrl.u32 %v799, 7
        %v801 = vsub.s32 2, %v800
        %v802 = vrot.slane %v660, %v801
        %v803 = vmul.f32 %v651, %v802
        %v804 = vmul.f32 %v652, %v802
        %v805 = vmul.f32 %v653, %v802
        %v806 = vmul.f32 %v654, %v802
        %v807 = vmul.f32 %v655, %v802
        %v808 = vmul.f32 %v656, %v802
        %v809 = vmul.f32 %v657, %v802
        %v810 = vmul.f32 %v658, %v802
        %811 = vadd.xlane.f32.xlu0 %v803
        %v812 = vpop.xlane.xlu0 %811
        %813 = vadd.xlane.f32.xlu0 %v804
        %v814 = vpop.xlane.xlu0 %813
        %815 = vadd.xlane.f32.xlu0 %v805
        %v816 = vpop.xlane.xlu0 %815
        %817 = vadd.xlane.f32.xlu0 %v806
        %v818 = vpop.xlane.xlu0 %817
        %819 = vadd.xlane.f32.xlu0 %v807
        %v820 = vpop.xlane.xlu0 %819
        %821 = vadd.xlane.f32.xlu0 %v808
        %v822 = vpop.xlane.xlu0 %821
        %823 = vadd.xlane.f32.xlu0 %v809
        %v824 = vpop.xlane.xlu0 %823
        %825 = vadd.xlane.f32.xlu0 %v810
        %v826 = vpop.xlane.xlu0 %825
        %v827 = vlaneseq
        %v828 = vshrl.u32 %v827, 7
        %v829 = vsub.s32 3, %v828
        %v830 = vrot.slane %v660, %v829
        %v831 = vadd.f32 %v812, %v830
        %v832 = vadd.f32 %v814, %v830
        %v833 = vadd.f32 %v816, %v830
        %v834 = vadd.f32 %v818, %v830
        %v835 = vadd.f32 %v820, %v830
        %v836 = vadd.f32 %v822, %v830
        %v837 = vadd.f32 %v824, %v830
        %v838 = vadd.f32 %v826, %v830
        %v839 = vmul.f32 %v831, %v221
        %v840 = vmul.f32 %v832, %v222
        %v841 = vmul.f32 %v833, %v223
        %v842 = vmul.f32 %v834, %v224
        %v843 = vmul.f32 %v835, %v225
        %v844 = vmul.f32 %v836, %v226
        %v845 = vmul.f32 %v837, %v227
        %v846 = vmul.f32 %v838, %v228
        %v847 = vlaneseq
        %v848 = vshrl.u32 %v847, 7
        %v849 = vsub.s32 1, %v848
        %v850 = vrot.slane %v660, %v849
        %v851 = vadd.f32 %v839, %v850
        %v852 = vadd.f32 %v840, %v850
        %v853 = vadd.f32 %v841, %v850
        %v854 = vadd.f32 %v842, %v850
        %v855 = vadd.f32 %v843, %v850
        %v856 = vadd.f32 %v844, %v850
        %v857 = vadd.f32 %v845, %v850
        %v858 = vadd.f32 %v846, %v850
        %v859 = vadd.f32 %v851, %v769
        %v860 = vadd.f32 %v852, %v772
        %v861 = vadd.f32 %v853, %v777
        %v862 = vadd.f32 %v854, %v780
        %v863 = vadd.f32 %v855, %v785
        %v864 = vadd.f32 %v856, %v788
        %v865 = vadd.f32 %v857, %v793
        %v866 = vadd.f32 %v858, %v796
        %v867 = vmax.f32 %v859, 0.0
        %v868 = vmax.f32 %v860, 0.0
        %v869 = vmax.f32 %v861, 0.0
        %v870 = vmax.f32 %v862, 0.0
        %v871 = vmax.f32 %v863, 0.0
        %v872 = vmax.f32 %v864, 0.0
        %v873 = vmax.f32 %v865, 0.0
        %v874 = vmax.f32 %v866, 0.0
        %875 = vst [vmem:[%s217] sm:$0xff] %v867
        %876 = vst [vmem:[%s217 + $0x8] sm:$0xff] %v868
        %877 = vst [vmem:[%s217 + $0x10] sm:$0xff] %v869
        %878 = vst [vmem:[%s217 + $0x18] sm:$0xff] %v870
        %879 = vst [vmem:[%s217 + $0x20] sm:$0xff] %v871
        %880 = vst [vmem:[%s217 + $0x28] sm:$0xff] %v872
        %881 = vst [vmem:[%s217 + $0x30] sm:$0xff] %v873
        %882 = vst [vmem:[%s217 + $0x38] sm:$0xff] %v874
        %s883 = sand.u32 %s97, 1
        %s884 = scalar_lea.sflag [#allocation4], %s883
        %s885 = sand.u32 %s97, 1
        %s886 = smul.addr %s885, 64
        %s887 = scalar_lea.vmem [#allocation8], %s886
        // Predicated region
        $region45: #{tpu_custom_call.1} parent=31 // pred_check
          %p888 = pneg %p107
        $region46: #{tpu_custom_call.1} parent=31 // pred_check_branch
          %890 = sbr.rel (%p888) target = $region48
        $region47: #{tpu_custom_call.1} parent=31 // pred_region
          %s891 = smul.u32 8, %s21
          %s893 = ssub.s32 1024, 1024
          %894 = vsyncadd %s884, %s893
          %s895 = smul.addr %s891, 128
          %s896 = scalar_lea.hbm %s3, %s895
          %s897 = sshll.u32 %s887, 4
          %s898 = int_to_ptr.vmem [resolvable:$true] %s897
          %903 = dma.vmem_to_hbm [thread:$0]  %s898, 1024, %s896, %s884, 128, 128, 8
        $region48: #{tpu_custom_call.1} parent=31 // pred_fallthru
          _
      $region32: #{tpu_custom_call.1} parent=5 // pred_fallthru
        _
      %p904 = scmp.le.s32.totalorder 2, %s16
      // Predicated region
      $region49: #{tpu_custom_call.1} parent=5 // pred_check
        %p905 = pneg %p904
      $region50: #{tpu_custom_call.1} parent=5 // pred_check_branch
        %907 = sbr.rel (%p905) target = $region52
      $region51: #{tpu_custom_call.1} parent=5 // pred_region
        %s908 = ssub.s32 %s16, 2
        // Predicated region
        $region53: #{tpu_custom_call.1} parent=51 // pred_check
          %p909 = pneg %p113
        $region54: #{tpu_custom_call.1} parent=51 // pred_check_branch
          %911 = sbr.rel (%p909) target = $region56
        $region55: #{tpu_custom_call.1} parent=51 // pred_region
          %s912 = sand.u32 %s98, 1
          %s913 = scalar_lea.sflag [#allocation4], %s912
          %s914 = sand.u32 %s98, 1
          %s915 = smul.addr %s914, 64
          %s916 = scalar_lea.vmem [#allocation8], %s915
          %917 = dma.done %s913, 1024
        $region56: #{tpu_custom_call.1} parent=51 // pred_fallthru
          _
      $region52: #{tpu_custom_call.1} parent=5 // pred_fallthru
        _
    $region6: #{tpu_custom_call.1} parent=1 // loop_footer
      %s20 = sadd.s32 1, %s16
    $region7: #{tpu_custom_call.1} parent=1 // loop_footer_branch
      %15 = sbr.rel target = $region3
    $region8: #{tpu_custom_call.1} parent=1 // loop_exit
      _
    %918 = vsyncpa [#allocation3], 1
    %s919 = scalar_lea.sflag [#allocation3], 1
    %920 = vsyncpa %s919, 1
    %921 = vsyncpa [#allocation6], 1
    %922 = vsyncpa [#allocation4], 1
    %s923 = scalar_lea.sflag [#allocation4], 1
    %924 = vsyncpa %s923, 1

</llo_original>
